<compile_context>
chip_gen: v7x
topology: tpu7x:2x2x1
jax: 0.10.0
libtpu: 0.0.40
codegen_flags: <defaults>
</compile_context>

<pallas_src>
import functools

import jax
import jax.numpy as jnp
from jax import lax
from jax.experimental import pallas as pl
from jax.experimental.pallas import tpu as pltpu


def _round_up(x, m):
    return ((x + m - 1) // m) * m


def _lstm_chunk_kernel(x_ref, wih_ref, whh_ref, b_ref, wout_ref, bout_ref,
                       out_ref, h_scr, c_scr, gx_scr, hall_scr,
                       *, tt, bt, hp):
    """Processes one (batch-tile, time-chunk) grid cell.

    x_ref:    (1, 1, tt*bt, I)   time-chunk of the input (time-major, flattened)
    wih_ref:  (I, 4*hp)          input->gates weights (gate order i, f, g, o)
    whh_ref:  (hp, 4*hp)         hidden->gates weights
    b_ref:    (1, 4*hp)          b_ih + b_hh
    wout_ref: (hp, Op)           head weights with eval-BN folded in
    bout_ref: (1, Op)            head bias with eval-BN folded in
    out_ref:  (1, 1, tt*bt, Op)  per-timestep logits (lane-dense, Op = 128-pad)
    h_scr, c_scr: (bt, hp)       recurrent state, persists across time chunks
    gx_scr:   (tt*bt, 4*hp)      precomputed input projection for the chunk
    hall_scr: (tt*bt, hp)        hidden states of the chunk (for the head)
    """
    # Reset the recurrent state at the start of each batch tile's time sweep.
    @pl.when(pl.program_id(1) == 0)
    def _():
        h_scr[...] = jnp.zeros_like(h_scr)
        c_scr[...] = jnp.zeros_like(c_scr)

    # (1) Input projection for the whole chunk: one big MXU matmul with the
    #     LSTM bias folded in -- hoisted out of the serial recurrence.
    x2d = x_ref[0, 0]                                       # (tt*bt, I)
    gx_scr[...] = (
        jnp.dot(x2d, wih_ref[...], preferred_element_type=jnp.float32)
        + b_ref[...])                                       # (tt*bt, 4*hp) f32

    # (2) Serial recurrence: only h @ W_hh remains inside the loop.  Fully
    #     unrolled over the static chunk length (== fori_loop unroll=True);
    #     all slice offsets are static and sublane/lane aligned.
    for t in range(tt):
        r0, r1 = t * bt, (t + 1) * bt
        gates = gx_scr[r0:r1, :] + jnp.dot(
            h_scr[...].astype(whh_ref.dtype), whh_ref[...],
            preferred_element_type=jnp.float32)             # (bt, 4*hp)
        # 128-lane-aligned gate blocks, PyTorch gate order (i, f, g, o).
        i_g = jax.nn.sigmoid(gates[:, 0 * hp:1 * hp])
        f_g = jax.nn.sigmoid(gates[:, 1 * hp:2 * hp])
        g_g = jnp.tanh(gates[:, 2 * hp:3 * hp])
        o_g = jax.nn.sigmoid(gates[:, 3 * hp:4 * hp])
        c_new = f_g * c_scr[...] + i_g * g_g                # f32 VPU math
        h_new = o_g * jnp.tanh(c_new)
        c_scr[...] = c_new
        h_scr[...] = h_new
        hall_scr[r0:r1, :] = h_new

    # (3) Head: eval-mode BatchNorm folded into W/b, applied once per chunk as
    #     a single lane-dense matmul (output last dim padded to 128 lanes).
    out_ref[0, 0] = (
        jnp.dot(hall_scr[...].astype(wout_ref.dtype), wout_ref[...],
                preferred_element_type=jnp.float32)
        + bout_ref[...])


def lstm_classifier_forward(x, params, eps=1e-5, *, time_tile=4, batch_tile=8,
                            mxu_dtype=jnp.float32):
    """x: (B, T, I) float32, batch-first like the PyTorch module. Returns (B, T, O).

    mxu_dtype=jnp.bfloat16 is recommended on v6e/v7x (halves weight/input DMA
    bytes); state/elementwise math stays f32 (v5e-safe).
    """
    B, T, I = x.shape
    H = params["w_hh"].shape[0]
    O = params["w_out"].shape[1]

    Hp = _round_up(H, 128)          # 128-lane aligned gate blocks
    Op = _round_up(O, 128)          # lane-dense output stores
    BT = _round_up(batch_tile, 8)   # sublane-aligned batch tile
    Bp = _round_up(B, BT)
    nB = Bp // BT
    TT = time_tile
    Tp = _round_up(T, TT)
    nT = Tp // TT

    f32 = jnp.float32

    # ---- Fold eval-mode BatchNorm1d into the head (exact, affine). ----
    scale = params["bn_gamma"] / jnp.sqrt(params["bn_var"] + eps)
    shift = params["bn_beta"] - params["bn_mean"] * scale
    w_head = scale[:, None] * params["w_out"]                 # (H, O)
    b_head = shift @ params["w_out"] + params["b_out"]        # (O,)

    # ---- Pad weights so every gate occupies its own 128-lane block. ----
    # Zero-padded hidden units stay exactly 0 through the recurrence
    # (c=0.5*0+0.5*tanh(0)=0, h=0.5*tanh(0)=0), so results are unaffected.
    def pad_gates(w, rows, rows_p):
        w4 = w.reshape(rows, 4, H)
        out = jnp.zeros((rows_p, 4, Hp), f32)
        out = out.at[:rows, :, :H].set(w4)
        return out.reshape(rows_p, 4 * Hp)

    w_ih_p = pad_gates(params["w_ih"], I, I).astype(mxu_dtype)       # (I, 4Hp)
    w_hh_p = pad_gates(params["w_hh"], H, Hp).astype(mxu_dtype)      # (Hp, 4Hp)
    b_p = pad_gates(params["b"].reshape(1, -1), 1, 1).astype(f32)    # (1, 4Hp)
    w_head_p = jnp.zeros((Hp, Op), f32).at[:H, :O].set(w_head).astype(mxu_dtype)
    b_head_p = jnp.zeros((1, Op), f32).at[0, :O].set(b_head)

    # ---- Pad/reshape the input: time-major, batch-tiled, time-chunked. ----
    x_tm = jnp.transpose(x, (1, 0, 2)).astype(mxu_dtype)             # (T, B, I)
    x_tm = jnp.pad(x_tm, ((0, Tp - T), (0, Bp - B), (0, 0)))
    # (Tp, Bp, I) -> (nT, nB, TT*BT, I): each grid cell gets a 2D slab.
    x_blk = (x_tm.reshape(nT, TT, nB, BT, I)
             .transpose(0, 2, 1, 3, 4)
             .reshape(nT, nB, TT * BT, I))

    kernel = functools.partial(_lstm_chunk_kernel, tt=TT, bt=BT, hp=Hp)

    out_blk = pl.pallas_call(
        kernel,
        out_shape=jax.ShapeDtypeStruct((nT, nB, TT * BT, Op), f32),
        grid_spec=pltpu.PrefetchScalarGridSpec(
            num_scalar_prefetch=0,
            grid=(nB, nT),   # batch tiles (parallel), time chunks (serial)
            in_specs=[
                pl.BlockSpec((1, 1, TT * BT, I), lambda b, t: (t, b, 0, 0)),
                pl.BlockSpec((I, 4 * Hp), lambda b, t: (0, 0)),
                pl.BlockSpec((Hp, 4 * Hp), lambda b, t: (0, 0)),
                pl.BlockSpec((1, 4 * Hp), lambda b, t: (0, 0)),
                pl.BlockSpec((Hp, Op), lambda b, t: (0, 0)),
                pl.BlockSpec((1, Op), lambda b, t: (0, 0)),
            ],
            out_specs=pl.BlockSpec((1, 1, TT * BT, Op),
                                   lambda b, t: (t, b, 0, 0)),
            scratch_shapes=[
                pltpu.VMEM((BT, Hp), f32),             # h_t (persists over t)
                pltpu.VMEM((BT, Hp), f32),             # c_t (persists over t)
                pltpu.VMEM((TT * BT, 4 * Hp), f32),    # chunk input projection
                pltpu.VMEM((TT * BT, Hp), f32),        # chunk hidden states
            ],
        ),
        compiler_params=pltpu.CompilerParams(
            dimension_semantics=("parallel", "arbitrary"),
            vmem_limit_bytes=32 * 1024 * 1024,  # safe on v5e/v6e/v7x at these tiles
        ),
    )(x_blk, w_ih_p, w_hh_p, b_p, w_head_p, b_head_p)

    # ---- Un-tile, strip padding, back to batch-first. ----
    out = (out_blk.reshape(nT, nB, TT, BT, Op)
           .transpose(0, 2, 1, 3, 4)
           .reshape(Tp, Bp, Op))[:T, :B, :O]
    return jnp.transpose(out, (1, 0, 2))  # (B, T, O)


def reference_forward(x, params, eps=1e-5):
    """Pure-JAX reference with PyTorch-equivalent math (unfolded BN)."""
    B, T, I = x.shape
    H = params["w_hh"].shape[0]
    scale = params["bn_gamma"] / jnp.sqrt(params["bn_var"] + eps)
    shift = params["bn_beta"] - params["bn_mean"] * scale

    def step(carry, x_t):
        h, c = carry
        gates = x_t @ params["w_ih"] + h @ params["w_hh"] + params["b"]
        i_g = jax.nn.sigmoid(gates[:, 0 * H:1 * H])
        f_g = jax.nn.sigmoid(gates[:, 1 * H:2 * H])
        g_g = jnp.tanh(gates[:, 2 * H:3 * H])
        o_g = jax.nn.sigmoid(gates[:, 3 * H:4 * H])
        c = f_g * c + i_g * g_g
        h = o_g * jnp.tanh(c)
        y = (h * scale + shift) @ params["w_out"] + params["b_out"]
        return (h, c), y

    init = (jnp.zeros((B, H), jnp.float32), jnp.zeros((B, H), jnp.float32))
    _, ys = lax.scan(step, init, jnp.transpose(x, (1, 0, 2)))
    return jnp.transpose(ys, (1, 0, 2))


def make_params(key, input_size, hidden_dim, output_size):
    """Deterministic synthetic parameters matching nn.LSTM / BatchNorm1d / Linear shapes."""
    ks = jax.random.split(key, 8)
    H, I, O = hidden_dim, input_size, output_size
    s = 0.1
    return {
        # nn.LSTM weight_ih_l0: (4H, I) -> stored transposed (I, 4H); gate order i,f,g,o
        "w_ih": s * jax.random.normal(ks[0], (I, 4 * H), jnp.float32),
        # nn.LSTM weight_hh_l0: (4H, H) -> stored transposed (H, 4H)
        "w_hh": s * jax.random.normal(ks[1], (H, 4 * H), jnp.float32),
        # bias_ih_l0 + bias_hh_l0 combined: (4H,)
        "b": s * jax.random.normal(ks[2], (4 * H,), jnp.float32),
        # BatchNorm1d(hidden_dim * num_directions) eval-mode stats/affine
        "bn_gamma": 1.0 + 0.1 * jax.random.normal(ks[3], (H,), jnp.float32),
        "bn_beta": 0.1 * jax.random.normal(ks[4], (H,), jnp.float32),
        "bn_mean": 0.1 * jax.random.normal(ks[5], (H,), jnp.float32),
        "bn_var": 0.5 + jax.random.uniform(ks[6], (H,), jnp.float32),
        # nn.Linear(H, O): weight (O, H) -> stored transposed (H, O), bias (O,)
        "w_out": s * jax.random.normal(ks[7], (H, O), jnp.float32),
        "b_out": 0.01 * jnp.arange(O, dtype=jnp.float32),
    }


if __name__ == "__main__":
    # Small shapes implied by the forward: batch-first sequence input.
    B, T = 2, 8
    input_size, hidden_dim, output_size = 16, 32, 8
    # num_layers=1, bidirectional=False; dropout layers identity at inference.
    # TODO(synk): multi-layer / bidirectional LSTM and pack_padded_sequence
    # (lengths is not None path) are not implemented; training-mode dropout omitted.

    key = jax.random.PRNGKey(0)
    kx, kp = jax.random.split(key)
    x = jax.random.normal(kx, (B, T, input_size), jnp.float32)
    params = make_params(kp, input_size, hidden_dim, output_size)

    out = lstm_classifier_forward(x, params)   # f32 MXU operands by default
    out = jax.block_until_ready(out)

    ref = reference_forward(x, params)
    assert out.shape == (B, T, output_size), out.shape
    # BN folding + big-matmul restructuring only reassociate FP ops -> tiny diffs.
    assert jnp.allclose(out, ref, rtol=1e-4, atol=1e-5), "mismatch vs pure-JAX reference"

    print("KERNEL_OK")
</pallas_src>

<mosaic_0001>
module attributes {stable_mosaic.version = 11 : i64} {
  func.func @_lstm_chunk_kernel(%arg0: i32, %arg1: i32, %arg2: memref<1x1x32x16xf32, #tpu.memory_space<vmem>>, %arg3: memref<16x512xf32, #tpu.memory_space<vmem>>, %arg4: memref<128x512xf32, #tpu.memory_space<vmem>>, %arg5: memref<1x512xf32, #tpu.memory_space<vmem>>, %arg6: memref<128x128xf32, #tpu.memory_space<vmem>>, %arg7: memref<1x128xf32, #tpu.memory_space<vmem>>, %arg8: memref<1x1x32x128xf32, #tpu.memory_space<vmem>>, %arg9: memref<8x128xf32, #tpu.memory_space<vmem>>, %arg10: memref<8x128xf32, #tpu.memory_space<vmem>>, %arg11: memref<32x512xf32, #tpu.memory_space<vmem>>, %arg12: memref<32x128xf32, #tpu.memory_space<vmem>>) attributes {dimension_semantics = [#tpu.dimension_semantics<parallel>, #tpu.dimension_semantics<arbitrary>], iteration_bounds = array<i64: 1, 2>, scalar_prefetch = 0 : i64, scratch_operands = 4 : i64, tpu.core_type = #tpu.core_type<tc>, window_params = [{transform_indices = @transform_0, window_bounds = array<i64: 1, 1, 32, 16>}, {pipeline_mode = #tpu.pipeline_mode<synchronous>, transform_indices = @transform_1, window_bounds = array<i64: 16, 512>}, {pipeline_mode = #tpu.pipeline_mode<synchronous>, transform_indices = @transform_2, window_bounds = array<i64: 128, 512>}, {pipeline_mode = #tpu.pipeline_mode<synchronous>, transform_indices = @transform_3, window_bounds = array<i64: 1, 512>}, {pipeline_mode = #tpu.pipeline_mode<synchronous>, transform_indices = @transform_4, window_bounds = array<i64: 128, 128>}, {pipeline_mode = #tpu.pipeline_mode<synchronous>, transform_indices = @transform_5, window_bounds = array<i64: 1, 128>}, {transform_indices = @transform_6, window_bounds = array<i64: 1, 1, 32, 128>}]} {
    %c0_i32 = arith.constant 0 : i32
    %0 = arith.cmpi eq, %arg1, %c0_i32 : i32
    %1 = arith.extui %0 : i1 to i32
    %c0_i32_0 = arith.constant 0 : i32
    %2 = arith.cmpi ne, %1, %c0_i32_0 : i32
    scf.if %2 {
      %cst_90 = arith.constant 0.000000e+00 : f32
      %156 = vector.broadcast %cst_90 : f32 to vector<8x128xf32>
      %c0_91 = arith.constant 0 : index
      %c0_92 = arith.constant 0 : index
      %157 = vector.load %arg9[%c0_91, %c0_92] : memref<8x128xf32, #tpu.memory_space<vmem>>, vector<8x128xf32>
      tpu.vector_store %arg9[%c0_91, %c0_92], %156 {strides = array<i32>} : memref<8x128xf32, #tpu.memory_space<vmem>>, vector<8x128xf32>,
      %cst_93 = arith.constant 0.000000e+00 : f32
      %158 = vector.broadcast %cst_93 : f32 to vector<8x128xf32>
      %c0_94 = arith.constant 0 : index
      %c0_95 = arith.constant 0 : index
      %159 = vector.load %arg10[%c0_94, %c0_95] : memref<8x128xf32, #tpu.memory_space<vmem>>, vector<8x128xf32>
      tpu.vector_store %arg10[%c0_94, %c0_95], %158 {strides = array<i32>} : memref<8x128xf32, #tpu.memory_space<vmem>>, vector<8x128xf32>,
    } else {
    }
    %c0 = arith.constant 0 : index
    %c0_1 = arith.constant 0 : index
    %c0_2 = arith.constant 0 : index
    %c0_3 = arith.constant 0 : index
    %3 = vector.load %arg2[%c0, %c0_1, %c0_2, %c0_3] : memref<1x1x32x16xf32, #tpu.memory_space<vmem>>, vector<1x1x32x16xf32>
    %4 = vector.shape_cast %3 : vector<1x1x32x16xf32> to vector<32x16xf32>
    %c0_4 = arith.constant 0 : index
    %c0_5 = arith.constant 0 : index
    %5 = vector.load %arg3[%c0_4, %c0_5] : memref<16x512xf32, #tpu.memory_space<vmem>>, vector<16x512xf32>
    %cst = arith.constant dense<0.000000e+00> : vector<32x512xf32>
    %6 = tpu.matmul %4, %5, %cst {dimension_numbers = #tpu.dot_dimension_numbers<[1], [0], [0], [1], [0, 0, 1, 1], [], []>} : vector<32x16xf32>, vector<16x512xf32>, vector<32x512xf32> -> vector<32x512xf32>
    %c0_6 = arith.constant 0 : index
    %c0_7 = arith.constant 0 : index
    %7 = vector.load %arg5[%c0_6, %c0_7] : memref<1x512xf32, #tpu.memory_space<vmem>>, vector<1x512xf32>
    %8 = vector.broadcast %7 : vector<1x512xf32> to vector<32x512xf32>
    %9 = arith.addf %6, %8 : vector<32x512xf32>
    %c0_8 = arith.constant 0 : index
    %c0_9 = arith.constant 0 : index
    %10 = vector.load %arg11[%c0_8, %c0_9] : memref<32x512xf32, #tpu.memory_space<vmem>>, vector<32x512xf32>
    tpu.vector_store %arg11[%c0_8, %c0_9], %9 {strides = array<i32>} : memref<32x512xf32, #tpu.memory_space<vmem>>, vector<32x512xf32>,
    %c0_10 = arith.constant 0 : index
    %c0_11 = arith.constant 0 : index
    %11 = vector.load %arg11[%c0_10, %c0_11] : memref<32x512xf32, #tpu.memory_space<vmem>>, vector<8x512xf32>
    %c0_12 = arith.constant 0 : index
    %c0_13 = arith.constant 0 : index
    %12 = vector.load %arg9[%c0_12, %c0_13] : memref<8x128xf32, #tpu.memory_space<vmem>>, vector<8x128xf32>
    %c0_14 = arith.constant 0 : index
    %c0_15 = arith.constant 0 : index
    %13 = vector.load %arg4[%c0_14, %c0_15] : memref<128x512xf32, #tpu.memory_space<vmem>>, vector<128x512xf32>
    %cst_16 = arith.constant dense<0.000000e+00> : vector<8x512xf32>
    %14 = tpu.matmul %12, %13, %cst_16 {dimension_numbers = #tpu.dot_dimension_numbers<[1], [0], [0], [1], [0, 0, 1, 1], [], []>} : vector<8x128xf32>, vector<128x512xf32>, vector<8x512xf32> -> vector<8x512xf32>
    %15 = arith.addf %11, %14 : vector<8x512xf32>
    %16 = vector.extract_strided_slice %15 {offsets = [0, 0], sizes = [8, 128], strides = [1, 1]} : vector<8x512xf32> to vector<8x128xf32>
    %17 = arith.negf %16 : vector<8x128xf32>
    %18 = math.exp %17 : vector<8x128xf32>
    %cst_17 = arith.constant 1.000000e+00 : f32
    %19 = vector.broadcast %cst_17 : f32 to vector<8x128xf32>
    %20 = arith.addf %19, %18 : vector<8x128xf32>
    %21 = arith.divf %19, %20 : vector<8x128xf32>
    %22 = vector.extract_strided_slice %15 {offsets = [0, 128], sizes = [8, 128], strides = [1, 1]} : vector<8x512xf32> to vector<8x128xf32>
    %23 = arith.negf %22 : vector<8x128xf32>
    %24 = math.exp %23 : vector<8x128xf32>
    %cst_18 = arith.constant 1.000000e+00 : f32
    %25 = vector.broadcast %cst_18 : f32 to vector<8x128xf32>
    %26 = arith.addf %25, %24 : vector<8x128xf32>
    %27 = arith.divf %25, %26 : vector<8x128xf32>
    %28 = vector.extract_strided_slice %15 {offsets = [0, 256], sizes = [8, 128], strides = [1, 1]} : vector<8x512xf32> to vector<8x128xf32>
    %29 = math.tanh %28 : vector<8x128xf32>
    %30 = vector.extract_strided_slice %15 {offsets = [0, 384], sizes = [8, 128], strides = [1, 1]} : vector<8x512xf32> to vector<8x128xf32>
    %31 = arith.negf %30 : vector<8x128xf32>
    %32 = math.exp %31 : vector<8x128xf32>
    %cst_19 = arith.constant 1.000000e+00 : f32
    %33 = vector.broadcast %cst_19 : f32 to vector<8x128xf32>
    %34 = arith.addf %33, %32 : vector<8x128xf32>
    %35 = arith.divf %33, %34 : vector<8x128xf32>
    %c0_20 = arith.constant 0 : index
    %c0_21 = arith.constant 0 : index
    %36 = vector.load %arg10[%c0_20, %c0_21] : memref<8x128xf32, #tpu.memory_space<vmem>>, vector<8x128xf32>
    %37 = arith.mulf %27, %36 : vector<8x128xf32>
    %38 = arith.mulf %21, %29 : vector<8x128xf32>
    %39 = arith.addf %37, %38 : vector<8x128xf32>
    %40 = math.tanh %39 : vector<8x128xf32>
    %41 = arith.mulf %35, %40 : vector<8x128xf32>
    %c0_22 = arith.constant 0 : index
    %c0_23 = arith.constant 0 : index
    %42 = vector.load %arg10[%c0_22, %c0_23] : memref<8x128xf32, #tpu.memory_space<vmem>>, vector<8x128xf32>
    tpu.vector_store %arg10[%c0_22, %c0_23], %39 {strides = array<i32>} : memref<8x128xf32, #tpu.memory_space<vmem>>, vector<8x128xf32>,
    %c0_24 = arith.constant 0 : index
    %c0_25 = arith.constant 0 : index
    %43 = vector.load %arg9[%c0_24, %c0_25] : memref<8x128xf32, #tpu.memory_space<vmem>>, vector<8x128xf32>
    tpu.vector_store %arg9[%c0_24, %c0_25], %41 {strides = array<i32>} : memref<8x128xf32, #tpu.memory_space<vmem>>, vector<8x128xf32>,
    %c0_26 = arith.constant 0 : index
    %c0_27 = arith.constant 0 : index
    %44 = vector.load %arg12[%c0_26, %c0_27] : memref<32x128xf32, #tpu.memory_space<vmem>>, vector<8x128xf32>
    tpu.vector_store %arg12[%c0_26, %c0_27], %41 {strides = array<i32>} : memref<32x128xf32, #tpu.memory_space<vmem>>, vector<8x128xf32>,
    %c8 = arith.constant 8 : index
    %c0_28 = arith.constant 0 : index
    %45 = vector.load %arg11[%c8, %c0_28] : memref<32x512xf32, #tpu.memory_space<vmem>>, vector<8x512xf32>
    %c0_29 = arith.constant 0 : index
    %c0_30 = arith.constant 0 : index
    %46 = vector.load %arg9[%c0_29, %c0_30] : memref<8x128xf32, #tpu.memory_space<vmem>>, vector<8x128xf32>
    %c0_31 = arith.constant 0 : index
    %c0_32 = arith.constant 0 : index
    %47 = vector.load %arg4[%c0_31, %c0_32] : memref<128x512xf32, #tpu.memory_space<vmem>>, vector<128x512xf32>
    %cst_33 = arith.constant dense<0.000000e+00> : vector<8x512xf32>
    %48 = tpu.matmul %46, %47, %cst_33 {dimension_numbers = #tpu.dot_dimension_numbers<[1], [0], [0], [1], [0, 0, 1, 1], [], []>} : vector<8x128xf32>, vector<128x512xf32>, vector<8x512xf32> -> vector<8x512xf32>
    %49 = arith.addf %45, %48 : vector<8x512xf32>
    %50 = vector.extract_strided_slice %49 {offsets = [0, 0], sizes = [8, 128], strides = [1, 1]} : vector<8x512xf32> to vector<8x128xf32>
    %51 = arith.negf %50 : vector<8x128xf32>
    %52 = math.exp %51 : vector<8x128xf32>
    %cst_34 = arith.constant 1.000000e+00 : f32
    %53 = vector.broadcast %cst_34 : f32 to vector<8x128xf32>
    %54 = arith.addf %53, %52 : vector<8x128xf32>
    %55 = arith.divf %53, %54 : vector<8x128xf32>
    %56 = vector.extract_strided_slice %49 {offsets = [0, 128], sizes = [8, 128], strides = [1, 1]} : vector<8x512xf32> to vector<8x128xf32>
    %57 = arith.negf %56 : vector<8x128xf32>
    %58 = math.exp %57 : vector<8x128xf32>
    %cst_35 = arith.constant 1.000000e+00 : f32
    %59 = vector.broadcast %cst_35 : f32 to vector<8x128xf32>
    %60 = arith.addf %59, %58 : vector<8x128xf32>
    %61 = arith.divf %59, %60 : vector<8x128xf32>
    %62 = vector.extract_strided_slice %49 {offsets = [0, 256], sizes = [8, 128], strides = [1, 1]} : vector<8x512xf32> to vector<8x128xf32>
    %63 = math.tanh %62 : vector<8x128xf32>
    %64 = vector.extract_strided_slice %49 {offsets = [0, 384], sizes = [8, 128], strides = [1, 1]} : vector<8x512xf32> to vector<8x128xf32>
    %65 = arith.negf %64 : vector<8x128xf32>
    %66 = math.exp %65 : vector<8x128xf32>
    %cst_36 = arith.constant 1.000000e+00 : f32
    %67 = vector.broadcast %cst_36 : f32 to vector<8x128xf32>
    %68 = arith.addf %67, %66 : vector<8x128xf32>
    %69 = arith.divf %67, %68 : vector<8x128xf32>
    %c0_37 = arith.constant 0 : index
    %c0_38 = arith.constant 0 : index
    %70 = vector.load %arg10[%c0_37, %c0_38] : memref<8x128xf32, #tpu.memory_space<vmem>>, vector<8x128xf32>
    %71 = arith.mulf %61, %70 : vector<8x128xf32>
    %72 = arith.mulf %55, %63 : vector<8x128xf32>
    %73 = arith.addf %71, %72 : vector<8x128xf32>
    %74 = math.tanh %73 : vector<8x128xf32>
    %75 = arith.mulf %69, %74 : vector<8x128xf32>
    %c0_39 = arith.constant 0 : index
    %c0_40 = arith.constant 0 : index
    %76 = vector.load %arg10[%c0_39, %c0_40] : memref<8x128xf32, #tpu.memory_space<vmem>>, vector<8x128xf32>
    tpu.vector_store %arg10[%c0_39, %c0_40], %73 {strides = array<i32>} : memref<8x128xf32, #tpu.memory_space<vmem>>, vector<8x128xf32>,
    %c0_41 = arith.constant 0 : index
    %c0_42 = arith.constant 0 : index
    %77 = vector.load %arg9[%c0_41, %c0_42] : memref<8x128xf32, #tpu.memory_space<vmem>>, vector<8x128xf32>
    tpu.vector_store %arg9[%c0_41, %c0_42], %75 {strides = array<i32>} : memref<8x128xf32, #tpu.memory_space<vmem>>, vector<8x128xf32>,
    %c8_43 = arith.constant 8 : index
    %c0_44 = arith.constant 0 : index
    %78 = vector.load %arg12[%c8_43, %c0_44] : memref<32x128xf32, #tpu.memory_space<vmem>>, vector<8x128xf32>
    tpu.vector_store %arg12[%c8_43, %c0_44], %75 {strides = array<i32>} : memref<32x128xf32, #tpu.memory_space<vmem>>, vector<8x128xf32>,
    %c16 = arith.constant 16 : index
    %c0_45 = arith.constant 0 : index
    %79 = vector.load %arg11[%c16, %c0_45] : memref<32x512xf32, #tpu.memory_space<vmem>>, vector<8x512xf32>
    %c0_46 = arith.constant 0 : index
    %c0_47 = arith.constant 0 : index
    %80 = vector.load %arg9[%c0_46, %c0_47] : memref<8x128xf32, #tpu.memory_space<vmem>>, vector<8x128xf32>
    %c0_48 = arith.constant 0 : index
    %c0_49 = arith.constant 0 : index
    %81 = vector.load %arg4[%c0_48, %c0_49] : memref<128x512xf32, #tpu.memory_space<vmem>>, vector<128x512xf32>
    %cst_50 = arith.constant dense<0.000000e+00> : vector<8x512xf32>
    %82 = tpu.matmul %80, %81, %cst_50 {dimension_numbers = #tpu.dot_dimension_numbers<[1], [0], [0], [1], [0, 0, 1, 1], [], []>} : vector<8x128xf32>, vector<128x512xf32>, vector<8x512xf32> -> vector<8x512xf32>
    %83 = arith.addf %79, %82 : vector<8x512xf32>
    %84 = vector.extract_strided_slice %83 {offsets = [0, 0], sizes = [8, 128], strides = [1, 1]} : vector<8x512xf32> to vector<8x128xf32>
    %85 = arith.negf %84 : vector<8x128xf32>
    %86 = math.exp %85 : vector<8x128xf32>
    %cst_51 = arith.constant 1.000000e+00 : f32
    %87 = vector.broadcast %cst_51 : f32 to vector<8x128xf32>
    %88 = arith.addf %87, %86 : vector<8x128xf32>
    %89 = arith.divf %87, %88 : vector<8x128xf32>
    %90 = vector.extract_strided_slice %83 {offsets = [0, 128], sizes = [8, 128], strides = [1, 1]} : vector<8x512xf32> to vector<8x128xf32>
    %91 = arith.negf %90 : vector<8x128xf32>
    %92 = math.exp %91 : vector<8x128xf32>
    %cst_52 = arith.constant 1.000000e+00 : f32
    %93 = vector.broadcast %cst_52 : f32 to vector<8x128xf32>
    %94 = arith.addf %93, %92 : vector<8x128xf32>
    %95 = arith.divf %93, %94 : vector<8x128xf32>
    %96 = vector.extract_strided_slice %83 {offsets = [0, 256], sizes = [8, 128], strides = [1, 1]} : vector<8x512xf32> to vector<8x128xf32>
    %97 = math.tanh %96 : vector<8x128xf32>
    %98 = vector.extract_strided_slice %83 {offsets = [0, 384], sizes = [8, 128], strides = [1, 1]} : vector<8x512xf32> to vector<8x128xf32>
    %99 = arith.negf %98 : vector<8x128xf32>
    %100 = math.exp %99 : vector<8x128xf32>
    %cst_53 = arith.constant 1.000000e+00 : f32
    %101 = vector.broadcast %cst_53 : f32 to vector<8x128xf32>
    %102 = arith.addf %101, %100 : vector<8x128xf32>
    %103 = arith.divf %101, %102 : vector<8x128xf32>
    %c0_54 = arith.constant 0 : index
    %c0_55 = arith.constant 0 : index
    %104 = vector.load %arg10[%c0_54, %c0_55] : memref<8x128xf32, #tpu.memory_space<vmem>>, vector<8x128xf32>
    %105 = arith.mulf %95, %104 : vector<8x128xf32>
    %106 = arith.mulf %89, %97 : vector<8x128xf32>
    %107 = arith.addf %105, %106 : vector<8x128xf32>
    %108 = math.tanh %107 : vector<8x128xf32>
    %109 = arith.mulf %103, %108 : vector<8x128xf32>
    %c0_56 = arith.constant 0 : index
    %c0_57 = arith.constant 0 : index
    %110 = vector.load %arg10[%c0_56, %c0_57] : memref<8x128xf32, #tpu.memory_space<vmem>>, vector<8x128xf32>
    tpu.vector_store %arg10[%c0_56, %c0_57], %107 {strides = array<i32>} : memref<8x128xf32, #tpu.memory_space<vmem>>, vector<8x128xf32>,
    %c0_58 = arith.constant 0 : index
    %c0_59 = arith.constant 0 : index
    %111 = vector.load %arg9[%c0_58, %c0_59] : memref<8x128xf32, #tpu.memory_space<vmem>>, vector<8x128xf32>
    tpu.vector_store %arg9[%c0_58, %c0_59], %109 {strides = array<i32>} : memref<8x128xf32, #tpu.memory_space<vmem>>, vector<8x128xf32>,
    %c16_60 = arith.constant 16 : index
    %c0_61 = arith.constant 0 : index
    %112 = vector.load %arg12[%c16_60, %c0_61] : memref<32x128xf32, #tpu.memory_space<vmem>>, vector<8x128xf32>
    tpu.vector_store %arg12[%c16_60, %c0_61], %109 {strides = array<i32>} : memref<32x128xf32, #tpu.memory_space<vmem>>, vector<8x128xf32>,
    %c24 = arith.constant 24 : index
    %c0_62 = arith.constant 0 : index
    %113 = vector.load %arg11[%c24, %c0_62] : memref<32x512xf32, #tpu.memory_space<vmem>>, vector<8x512xf32>
    %c0_63 = arith.constant 0 : index
    %c0_64 = arith.constant 0 : index
    %114 = vector.load %arg9[%c0_63, %c0_64] : memref<8x128xf32, #tpu.memory_space<vmem>>, vector<8x128xf32>
    %c0_65 = arith.constant 0 : index
    %c0_66 = arith.constant 0 : index
    %115 = vector.load %arg4[%c0_65, %c0_66] : memref<128x512xf32, #tpu.memory_space<vmem>>, vector<128x512xf32>
    %cst_67 = arith.constant dense<0.000000e+00> : vector<8x512xf32>
    %116 = tpu.matmul %114, %115, %cst_67 {dimension_numbers = #tpu.dot_dimension_numbers<[1], [0], [0], [1], [0, 0, 1, 1], [], []>} : vector<8x128xf32>, vector<128x512xf32>, vector<8x512xf32> -> vector<8x512xf32>
    %117 = arith.addf %113, %116 : vector<8x512xf32>
    %118 = vector.extract_strided_slice %117 {offsets = [0, 0], sizes = [8, 128], strides = [1, 1]} : vector<8x512xf32> to vector<8x128xf32>
    %119 = arith.negf %118 : vector<8x128xf32>
    %120 = math.exp %119 : vector<8x128xf32>
    %cst_68 = arith.constant 1.000000e+00 : f32
    %121 = vector.broadcast %cst_68 : f32 to vector<8x128xf32>
    %122 = arith.addf %121, %120 : vector<8x128xf32>
    %123 = arith.divf %121, %122 : vector<8x128xf32>
    %124 = vector.extract_strided_slice %117 {offsets = [0, 128], sizes = [8, 128], strides = [1, 1]} : vector<8x512xf32> to vector<8x128xf32>
    %125 = arith.negf %124 : vector<8x128xf32>
    %126 = math.exp %125 : vector<8x128xf32>
    %cst_69 = arith.constant 1.000000e+00 : f32
    %127 = vector.broadcast %cst_69 : f32 to vector<8x128xf32>
    %128 = arith.addf %127, %126 : vector<8x128xf32>
    %129 = arith.divf %127, %128 : vector<8x128xf32>
    %130 = vector.extract_strided_slice %117 {offsets = [0, 256], sizes = [8, 128], strides = [1, 1]} : vector<8x512xf32> to vector<8x128xf32>
    %131 = math.tanh %130 : vector<8x128xf32>
    %132 = vector.extract_strided_slice %117 {offsets = [0, 384], sizes = [8, 128], strides = [1, 1]} : vector<8x512xf32> to vector<8x128xf32>
    %133 = arith.negf %132 : vector<8x128xf32>
    %134 = math.exp %133 : vector<8x128xf32>
    %cst_70 = arith.constant 1.000000e+00 : f32
    %135 = vector.broadcast %cst_70 : f32 to vector<8x128xf32>
    %136 = arith.addf %135, %134 : vector<8x128xf32>
    %137 = arith.divf %135, %136 : vector<8x128xf32>
    %c0_71 = arith.constant 0 : index
    %c0_72 = arith.constant 0 : index
    %138 = vector.load %arg10[%c0_71, %c0_72] : memref<8x128xf32, #tpu.memory_space<vmem>>, vector<8x128xf32>
    %139 = arith.mulf %129, %138 : vector<8x128xf32>
    %140 = arith.mulf %123, %131 : vector<8x128xf32>
    %141 = arith.addf %139, %140 : vector<8x128xf32>
    %142 = math.tanh %141 : vector<8x128xf32>
    %143 = arith.mulf %137, %142 : vector<8x128xf32>
    %c0_73 = arith.constant 0 : index
    %c0_74 = arith.constant 0 : index
    %144 = vector.load %arg10[%c0_73, %c0_74] : memref<8x128xf32, #tpu.memory_space<vmem>>, vector<8x128xf32>
    tpu.vector_store %arg10[%c0_73, %c0_74], %141 {strides = array<i32>} : memref<8x128xf32, #tpu.memory_space<vmem>>, vector<8x128xf32>,
    %c0_75 = arith.constant 0 : index
    %c0_76 = arith.constant 0 : index
    %145 = vector.load %arg9[%c0_75, %c0_76] : memref<8x128xf32, #tpu.memory_space<vmem>>, vector<8x128xf32>
    tpu.vector_store %arg9[%c0_75, %c0_76], %143 {strides = array<i32>} : memref<8x128xf32, #tpu.memory_space<vmem>>, vector<8x128xf32>,
    %c24_77 = arith.constant 24 : index
    %c0_78 = arith.constant 0 : index
    %146 = vector.load %arg12[%c24_77, %c0_78] : memref<32x128xf32, #tpu.memory_space<vmem>>, vector<8x128xf32>
    tpu.vector_store %arg12[%c24_77, %c0_78], %143 {strides = array<i32>} : memref<32x128xf32, #tpu.memory_space<vmem>>, vector<8x128xf32>,
    %c0_79 = arith.constant 0 : index
    %c0_80 = arith.constant 0 : index
    %147 = vector.load %arg12[%c0_79, %c0_80] : memref<32x128xf32, #tpu.memory_space<vmem>>, vector<32x128xf32>
    %c0_81 = arith.constant 0 : index
    %c0_82 = arith.constant 0 : index
    %148 = vector.load %arg6[%c0_81, %c0_82] : memref<128x128xf32, #tpu.memory_space<vmem>>, vector<128x128xf32>
    %cst_83 = arith.constant dense<0.000000e+00> : vector<32x128xf32>
    %149 = tpu.matmul %147, %148, %cst_83 {dimension_numbers = #tpu.dot_dimension_numbers<[1], [0], [0], [1], [0, 0, 1, 1], [], []>} : vector<32x128xf32>, vector<128x128xf32>, vector<32x128xf32> -> vector<32x128xf32>
    %c0_84 = arith.constant 0 : index
    %c0_85 = arith.constant 0 : index
    %150 = vector.load %arg7[%c0_84, %c0_85] : memref<1x128xf32, #tpu.memory_space<vmem>>, vector<1x128xf32>
    %151 = vector.broadcast %150 : vector<1x128xf32> to vector<32x128xf32>
    %152 = arith.addf %149, %151 : vector<32x128xf32>
    %c0_86 = arith.constant 0 : index
    %c0_87 = arith.constant 0 : index
    %c0_88 = arith.constant 0 : index
    %c0_89 = arith.constant 0 : index
    %153 = vector.load %arg8[%c0_86, %c0_87, %c0_88, %c0_89] : memref<1x1x32x128xf32, #tpu.memory_space<vmem>>, vector<1x1x32x128xf32>
    %154 = vector.shape_cast %153 : vector<1x1x32x128xf32> to vector<32x128xf32>
    %155 = vector.shape_cast %152 : vector<32x128xf32> to vector<1x1x32x128xf32>
    tpu.vector_store %arg8[%c0_86, %c0_87, %c0_88, %c0_89], %155 {strides = array<i32>} : memref<1x1x32x128xf32, #tpu.memory_space<vmem>>, vector<1x1x32x128xf32>,
    return
  }
  func.func @transform_0(%arg0: i32, %arg1: i32) -> (i32, i32, i32, i32) {
    %c0_i32 = arith.constant 0 : i32
    %c0_i32_0 = arith.constant 0 : i32
    %c0_i32_1 = arith.constant 0 : i32
    return %arg1, %arg0, %c0_i32, %c0_i32_0 : i32, i32, i32, i32
  }
  func.func @transform_1(%arg0: i32, %arg1: i32) -> (i32, i32) {
    %c0_i32 = arith.constant 0 : i32
    %c0_i32_0 = arith.constant 0 : i32
    %c0_i32_1 = arith.constant 0 : i32
    return %c0_i32, %c0_i32_0 : i32, i32
  }
  func.func @transform_2(%arg0: i32, %arg1: i32) -> (i32, i32) {
    %c0_i32 = arith.constant 0 : i32
    %c0_i32_0 = arith.constant 0 : i32
    %c0_i32_1 = arith.constant 0 : i32
    return %c0_i32, %c0_i32_0 : i32, i32
  }
  func.func @transform_3(%arg0: i32, %arg1: i32) -> (i32, i32) {
    %c0_i32 = arith.constant 0 : i32
    %c0_i32_0 = arith.constant 0 : i32
    %c0_i32_1 = arith.constant 0 : i32
    return %c0_i32, %c0_i32_0 : i32, i32
  }
  func.func @transform_4(%arg0: i32, %arg1: i32) -> (i32, i32) {
    %c0_i32 = arith.constant 0 : i32
    %c0_i32_0 = arith.constant 0 : i32
    %c0_i32_1 = arith.constant 0 : i32
    return %c0_i32, %c0_i32_0 : i32, i32
  }
  func.func @transform_5(%arg0: i32, %arg1: i32) -> (i32, i32) {
    %c0_i32 = arith.constant 0 : i32
    %c0_i32_0 = arith.constant 0 : i32
    %c0_i32_1 = arith.constant 0 : i32
    return %c0_i32, %c0_i32_0 : i32, i32
  }
  func.func @transform_6(%arg0: i32, %arg1: i32) -> (i32, i32, i32, i32) {
    %c0_i32 = arith.constant 0 : i32
    %c0_i32_0 = arith.constant 0 : i32
    %c0_i32_1 = arith.constant 0 : i32
    return %arg1, %arg0, %c0_i32, %c0_i32_0 : i32, i32, i32, i32
  }
}

</mosaic_0001>

<llo_original>
// kernel: tpu_custom_call.1
$region0: #{tpu_custom_call.1}
  #allocation0 [shape = 'u32[]', space=smem, size = 0x4, offset = 0x4, fixed_abs, tag = 'smem constant byte address 0x4 - core index']
  #allocation1 [shape = 'u32[144,128]{1,0:T(1,128)}', space=vmem, size = 0x12000, scoped, tag = 'internal scratch']
  #allocation2 [shape = 'f32[8,128]{1,0:T(8,128)}', space=vmem, size = 0x1000, scoped, tag = 'scratch operand']
  #allocation3 [shape = 'f32[8,128]{1,0:T(8,128)}', space=vmem, size = 0x1000, scoped, tag = 'scratch operand']
  #allocation4 [shape = 'f32[32,512]{1,0:T(8,128)}', space=vmem, size = 0x10000, scoped, tag = 'scratch operand']
  #allocation5 [shape = 'f32[32,128]{1,0:T(8,128)}', space=vmem, size = 0x4000, scoped, tag = 'scratch operand']
  %s0 = inlined_call_operand.vmem [shape: f32[2,1,32,16], index: 0, kind: input, shape index: {}]
  %s1 = inlined_call_operand.vmem [shape: f32[16,512], index: 1, kind: input, shape index: {}]
  %s2 = inlined_call_operand.hbm [shape: f32[128,512], index: 2, kind: input, shape index: {}]
  %s3 = inlined_call_operand.vmem [shape: f32[1,512], index: 3, kind: input, shape index: {}]
  %s4 = inlined_call_operand.hbm [shape: f32[128,128], index: 4, kind: input, shape index: {}]
  %s5 = inlined_call_operand.vmem [shape: f32[1,128], index: 5, kind: input, shape index: {}]
  %s6 = inlined_call_operand.hbm [shape: f32[2,1,32,128], index: 6, kind: output, shape index: {}]
  %s7 = sld [smem:[#allocation0]]
  $region69: #{tpu_custom_call.1} parent=0
    _
  %s9 = ssub.s32 1, %s7
  %s10 = scalar_select 0, %s9, %s7
  $region1: #{tpu_custom_call.1} parent=0
    #allocation6 [shape = 'u8[262144]{0}', space=vmem, size = 0x40000, scoped, tag = 'input window, operand 2, single buffered']
    #allocation7 [shape = 's32[2]{0}', space=sflag, size = 0x8, scoped, tag = 'scoped memory for tpu_custom_call.1']
    #allocation8 [shape = 's32[2]{0}', space=sflag, size = 0x8, scoped, tag = 'scoped memory for tpu_custom_call.1']
    #allocation9 [shape = 'u8[65536]{0}', space=vmem, size = 0x10000, scoped, tag = 'input window, operand 4, single buffered']
    #allocation10 [shape = 's32[1]{0}', space=sflag, size = 0x4, scoped, tag = 'scoped memory for tpu_custom_call.1']
    #allocation11 [shape = 'u8[32768]{0}', space=vmem, size = 0x8000, scoped, tag = 'output window, operand 0']
    %11 = vsyncpa [#allocation7], 0
    %12 = vsyncpa [#allocation10], 0
    %13 = vsyncpa [#allocation8], 0
    %s14 = scalar_lea.sflag [#allocation8], 1
    %15 = vsyncpa %s14, 0
    loop: start=0, step=1, limit=4
    $region2: #{tpu_custom_call.1} parent=1 // loop_pre_header
      _
    $region3: #{tpu_custom_call.1} parent=1 // loop_header
      %s17 = sphi 0, %s21
      %p18 = scmp.ge.s32.totalorder %s17, 4
      %s24 = sphi 0, %s36
      %s25 = sphi 0, %s32
      %s26 = sphi 0, %s24
      %s27 = sphi 0, %s25
      %s28 = sphi 0, %s26
      %s29 = sphi 0, %s27
      %s41 = sphi 0, %s43
      %s44 = sphi 0, %s41
      %s45 = sphi 0, %s44
      %s61 = sphi 0, %s45
      %s65 = sphi 0, %s65
      %s67 = sphi 0, %s65
      %s68 = sphi 0, %s67
      %s82 = sphi 0, %s68
      %s86 = sphi 0, %s86
      %s88 = sphi 0, %s86
      %s89 = sphi 0, %s88
      %s103 = sphi 0, %s89
      %s107 = sphi 0, %s107
      %s109 = sphi 0, %s107
      %s110 = sphi 0, %s109
      %s124 = sphi 0, %s110
      %s128 = sphi 0, %s128
      %s130 = sphi 0, %s128
      %s131 = sphi 0, %s130
      %s145 = sphi 0, %s131
      %s149 = sphi 0, %s149
      %s151 = sphi 0, %s149
      %s152 = sphi 0, %s151
      %s166 = sphi 0, %s152
      %s174 = sphi 0, %s176
      %s177 = sphi 0, %s174
      %s178 = sphi 0, %s177
      %s194 = sphi 0, %s178
    $region4: #{tpu_custom_call.1} parent=1 // loop_header_branch
      %20 = sbr.rel (%p18) target = $region8
    $region5: #{tpu_custom_call.1} parent=1 // loop_body
      %s22 = ssub.s32 %s17, 1
      %s23 = ssub.s32 %s17, 2
      %s30 = sadd.s32 1, %s25
      %p31 = scmp.ge.s32.totalorder %s30, 2
      %s32 = scalar_select %p31, 0, %s30
      %s33 = sadd.s32 1, %s24
      %s34 = scalar_select %p31, %s33, %s24
      %p35 = scmp.ge.s32.totalorder %s34, 1
      %s36 = scalar_select %p35, 0, %s34
      %s37 = ssub.s32 %s25, %s32
      %s38 = ssub.s32 %s24, %s36
      %s39 = sor.u32 %s37, %s38
      %p40 = scmp.eq.s32.totalorder %s39, 0
      %s42 = sadd.s32 %s41, 1
      %s43 = scalar_select %p40, %s41, %s42
      %p46 = pneg %p40
      %p47 = scmp.eq.s32.totalorder %s17, 1
      %p48 = por %p46, %p47
      %p49 = scmp.ne.s32.totalorder %s41, %s44
      %p50 = scmp.eq.s32.totalorder %s17, 0
      %p51 = por %p49, %p50
      %p52 = scmp.ne.s32.totalorder %s41, %s44
      %p53 = scmp.eq.s32.totalorder %s22, 1
      %p54 = por %p52, %p53
      %p55 = scmp.ne.s32.totalorder %s44, %s45
      %p56 = scmp.eq.s32.totalorder %s22, 0
      %p57 = por %p55, %p56
      %p58 = scmp.ne.s32.totalorder %s44, %s45
      %p59 = scmp.eq.s32.totalorder %s23, 1
      %p60 = por %p58, %p59
      %p62 = scmp.ne.s32.totalorder %s45, %s61
      %p63 = scmp.eq.s32.totalorder %s23, 0
      %p64 = por %p62, %p63
      %s66 = sadd.s32 %s65, 1
      %p69 = scmp.eq.s32.totalorder %s17, 1
      %p70 = scmp.ne.s32.totalorder %s65, %s67
      %p71 = scmp.eq.s32.totalorder %s17, 0
      %p72 = por %p70, %p71
      %p73 = scmp.ne.s32.totalorder %s65, %s67
      %p74 = scmp.eq.s32.totalorder %s22, 1
      %p75 = por %p73, %p74
      %p76 = scmp.ne.s32.totalorder %s67, %s68
      %p77 = scmp.eq.s32.totalorder %s22, 0
      %p78 = por %p76, %p77
      %p79 = scmp.ne.s32.totalorder %s67, %s68
      %p80 = scmp.eq.s32.totalorder %s23, 1
      %p81 = por %p79, %p80
      %p83 = scmp.ne.s32.totalorder %s68, %s82
      %p84 = scmp.eq.s32.totalorder %s23, 0
      %p85 = por %p83, %p84
      %s87 = sadd.s32 %s86, 1
      %p90 = scmp.eq.s32.totalorder %s17, 1
      %p91 = scmp.ne.s32.totalorder %s86, %s88
      %p92 = scmp.eq.s32.totalorder %s17, 0
      %p93 = por %p91, %p92
      %p94 = scmp.ne.s32.totalorder %s86, %s88
      %p95 = scmp.eq.s32.totalorder %s22, 1
      %p96 = por %p94, %p95
      %p97 = scmp.ne.s32.totalorder %s88, %s89
      %p98 = scmp.eq.s32.totalorder %s22, 0
      %p99 = por %p97, %p98
      %p100 = scmp.ne.s32.totalorder %s88, %s89
      %p101 = scmp.eq.s32.totalorder %s23, 1
      %p102 = por %p100, %p101
      %p104 = scmp.ne.s32.totalorder %s89, %s103
      %p105 = scmp.eq.s32.totalorder %s23, 0
      %p106 = por %p104, %p105
      %s108 = sadd.s32 %s107, 1
      %p111 = scmp.eq.s32.totalorder %s17, 1
      %p112 = scmp.ne.s32.totalorder %s107, %s109
      %p113 = scmp.eq.s32.totalorder %s17, 0
      %p114 = por %p112, %p113
      %p115 = scmp.ne.s32.totalorder %s107, %s109
      %p116 = scmp.eq.s32.totalorder %s22, 1
      %p117 = por %p115, %p116
      %p118 = scmp.ne.s32.totalorder %s109, %s110
      %p119 = scmp.eq.s32.totalorder %s22, 0
      %p120 = por %p118, %p119
      %p121 = scmp.ne.s32.totalorder %s109, %s110
      %p122 = scmp.eq.s32.totalorder %s23, 1
      %p123 = por %p121, %p122
      %p125 = scmp.ne.s32.totalorder %s110, %s124
      %p126 = scmp.eq.s32.totalorder %s23, 0
      %p127 = por %p125, %p126
      %s129 = sadd.s32 %s128, 1
      %p132 = scmp.eq.s32.totalorder %s17, 1
      %p133 = scmp.ne.s32.totalorder %s128, %s130
      %p134 = scmp.eq.s32.totalorder %s17, 0
      %p135 = por %p133, %p134
      %p136 = scmp.ne.s32.totalorder %s128, %s130
      %p137 = scmp.eq.s32.totalorder %s22, 1
      %p138 = por %p136, %p137
      %p139 = scmp.ne.s32.totalorder %s130, %s131
      %p140 = scmp.eq.s32.totalorder %s22, 0
      %p141 = por %p139, %p140
      %p142 = scmp.ne.s32.totalorder %s130, %s131
      %p143 = scmp.eq.s32.totalorder %s23, 1
      %p144 = por %p142, %p143
      %p146 = scmp.ne.s32.totalorder %s131, %s145
      %p147 = scmp.eq.s32.totalorder %s23, 0
      %p148 = por %p146, %p147
      %s150 = sadd.s32 %s149, 1
      %p153 = scmp.eq.s32.totalorder %s17, 1
      %p154 = scmp.ne.s32.totalorder %s149, %s151
      %p155 = scmp.eq.s32.totalorder %s17, 0
      %p156 = por %p154, %p155
      %p157 = scmp.ne.s32.totalorder %s149, %s151
      %p158 = scmp.eq.s32.totalorder %s22, 1
      %p159 = por %p157, %p158
      %p160 = scmp.ne.s32.totalorder %s151, %s152
      %p161 = scmp.eq.s32.totalorder %s22, 0
      %p162 = por %p160, %p161
      %p163 = scmp.ne.s32.totalorder %s151, %s152
      %p164 = scmp.eq.s32.totalorder %s23, 1
      %p165 = por %p163, %p164
      %p167 = scmp.ne.s32.totalorder %s152, %s166
      %p168 = scmp.eq.s32.totalorder %s23, 0
      %p169 = por %p167, %p168
      %s170 = ssub.s32 %s25, %s32
      %s171 = ssub.s32 %s24, %s36
      %s172 = sor.u32 %s170, %s171
      %p173 = scmp.eq.s32.totalorder %s172, 0
      %s175 = sadd.s32 %s174, 1
      %s176 = scalar_select %p173, %s174, %s175
      %p179 = pneg %p173
      %p180 = scmp.eq.s32.totalorder %s17, 1
      %p181 = por %p179, %p180
      %p182 = scmp.ne.s32.totalorder %s174, %s177
      %p183 = scmp.eq.s32.totalorder %s17, 0
      %p184 = por %p182, %p183
      %p185 = scmp.ne.s32.totalorder %s174, %s177
      %p186 = scmp.eq.s32.totalorder %s22, 1
      %p187 = por %p185, %p186
      %p188 = scmp.ne.s32.totalorder %s177, %s178
      %p189 = scmp.eq.s32.totalorder %s22, 0
      %p190 = por %p188, %p189
      %p191 = scmp.ne.s32.totalorder %s177, %s178
      %p192 = scmp.eq.s32.totalorder %s23, 1
      %p193 = por %p191, %p192
      %p195 = scmp.ne.s32.totalorder %s178, %s194
      %p196 = scmp.eq.s32.totalorder %s23, 0
      %p197 = por %p195, %p196
      %p198 = scmp.le.s32.totalorder 1, %s17
      %p199 = scmp.lt.s32.totalorder %s17, 3
      %p200 = pnand %p198, %p199
      %p201 = pneg %p200
      // Predicated region
      $region9: #{tpu_custom_call.1} parent=5 // pred_check
        _
      $region10: #{tpu_custom_call.1} parent=5 // pred_check_branch
        %203 = sbr.rel (%p200) target = $region12
      $region11: #{tpu_custom_call.1} parent=5 // pred_region
        %s204 = ssub.s32 %s17, 1
        // Predicated region
        $region13: #{tpu_custom_call.1} parent=11 // pred_check
          %p205 = pneg %p78
        $region14: #{tpu_custom_call.1} parent=11 // pred_check_branch
          %207 = sbr.rel (%p205) target = $region16
        $region15: #{tpu_custom_call.1} parent=11 // pred_region
          _
        $region16: #{tpu_custom_call.1} parent=11 // pred_fallthru
          _
        // Predicated region
        $region17: #{tpu_custom_call.1} parent=11 // pred_check
          %p208 = pneg %p99
        $region18: #{tpu_custom_call.1} parent=11 // pred_check_branch
          %210 = sbr.rel (%p208) target = $region20
        $region19: #{tpu_custom_call.1} parent=11 // pred_region
          %s212 = ssub.s32 8192, 8192
          %213 = vsyncadd [#allocation7], %s212
          %s214 = sshll.u32 [#allocation6], 4
          %s215 = int_to_ptr.vmem [resolvable:$true] %s214
          %220 = dma.hbm_to_vmem [thread:$0]  %s2, 8192, %s215, [#allocation7], 512, 512, 32
        $region20: #{tpu_custom_call.1} parent=11 // pred_fallthru
          _
        // Predicated region
        $region21: #{tpu_custom_call.1} parent=11 // pred_check
          %p221 = pneg %p120
        $region22: #{tpu_custom_call.1} parent=11 // pred_check_branch
          %223 = sbr.rel (%p221) target = $region24
        $region23: #{tpu_custom_call.1} parent=11 // pred_region
          _
        $region24: #{tpu_custom_call.1} parent=11 // pred_fallthru
          _
        // Predicated region
        $region25: #{tpu_custom_call.1} parent=11 // pred_check
          %p224 = pneg %p141
        $region26: #{tpu_custom_call.1} parent=11 // pred_check_branch
          %226 = sbr.rel (%p224) target = $region28
        $region27: #{tpu_custom_call.1} parent=11 // pred_region
          %s228 = ssub.s32 2048, 2048
          %229 = vsyncadd [#allocation10], %s228
          %s230 = sshll.u32 [#allocation9], 4
          %s231 = int_to_ptr.vmem [resolvable:$true] %s230
          %236 = dma.hbm_to_vmem [thread:$0]  %s4, 2048, %s231, [#allocation10], 128, 128, 8
        $region28: #{tpu_custom_call.1} parent=11 // pred_fallthru
          _
        // Predicated region
        $region29: #{tpu_custom_call.1} parent=11 // pred_check
          %p237 = pneg %p162
        $region30: #{tpu_custom_call.1} parent=11 // pred_check_branch
          %239 = sbr.rel (%p237) target = $region32
        $region31: #{tpu_custom_call.1} parent=11 // pred_region
          _
        $region32: #{tpu_custom_call.1} parent=11 // pred_fallthru
          _
      $region12: #{tpu_custom_call.1} parent=5 // pred_fallthru
        _
      %p240 = scmp.lt.s32.totalorder %s17, 2
      // Predicated region
      $region33: #{tpu_custom_call.1} parent=5 // pred_check
        %p241 = pneg %p240
      $region34: #{tpu_custom_call.1} parent=5 // pred_check_branch
        %243 = sbr.rel (%p241) target = $region36
      $region35: #{tpu_custom_call.1} parent=5 // pred_region
        // Predicated region
        $region37: #{tpu_custom_call.1} parent=35 // pred_check
          %p244 = pneg %p51
        $region38: #{tpu_custom_call.1} parent=35 // pred_check_branch
          %246 = sbr.rel (%p244) target = $region40
        $region39: #{tpu_custom_call.1} parent=35 // pred_region
          %p247 = scmp.lt.s32.totalorder %s25, 1
          %s248 = scalar_select %p247, %s25, 1
          %p249 = scmp.lt.s32.totalorder %s24, 0
          %s250 = scalar_select %p249, %s24, 0
          %s251 = smul.addr %s250, 4
          %s252 = smul.addr %s248, 4
          %s253 = sadd.s32 %s251, %s252
          %s254 = smul.addr %s253, 8
          %s255 = scalar_lea.vmem %s0, %s254
        $region40: #{tpu_custom_call.1} parent=35 // pred_fallthru
          _
      $region36: #{tpu_custom_call.1} parent=5 // pred_fallthru
        _
      %p256 = scmp.le.s32.totalorder 1, %s17
      %p257 = scmp.lt.s32.totalorder %s17, 3
      %p258 = pnand %p256, %p257
      %p259 = pneg %p258
      // Predicated region
      $region41: #{tpu_custom_call.1} parent=5 // pred_check
        _
      $region42: #{tpu_custom_call.1} parent=5 // pred_check_branch
        %261 = sbr.rel (%p258) target = $region44
      $region43: #{tpu_custom_call.1} parent=5 // pred_region
        %s262 = ssub.s32 %s17, 1
        // Predicated region
        $region45: #{tpu_custom_call.1} parent=43 // pred_check
          %p263 = pneg %p99
        $region46: #{tpu_custom_call.1} parent=43 // pred_check_branch
          %265 = sbr.rel (%p263) target = $region48
        $region47: #{tpu_custom_call.1} parent=43 // pred_region
          %266 = dma.done [#allocation7], 8192
        $region48: #{tpu_custom_call.1} parent=43 // pred_fallthru
          _
        // Predicated region
        $region49: #{tpu_custom_call.1} parent=43 // pred_check
          %p267 = pneg %p141
        $region50: #{tpu_custom_call.1} parent=43 // pred_check_branch
          %269 = sbr.rel (%p267) target = $region52
        $region51: #{tpu_custom_call.1} parent=43 // pred_region
          %270 = dma.done [#allocation10], 2048
        $region52: #{tpu_custom_call.1} parent=43 // pred_fallthru
          _
        %p271 = scmp.lt.s32.totalorder %s27, 1
        %s272 = scalar_select %p271, %s27, 1
        %p273 = scmp.lt.s32.totalorder %s26, 0
        %s274 = scalar_select %p273, %s26, 0
        %s275 = smul.addr %s274, 4
        %s276 = smul.addr %s272, 4
        %s277 = sadd.s32 %s275, %s276
        %s278 = smul.addr %s277, 8
        %s279 = scalar_lea.vmem %s0, %s278
        %p280 = pneg %p57
        %p281 = pneg %p54
        %p282 = pneg %p78
        %p283 = pneg %p75
        %p284 = pneg %p99
        %p285 = pneg %p96
        %p286 = pneg %p120
        %p287 = pneg %p117
        %p288 = pneg %p141
        %p289 = pneg %p138
        %p290 = pneg %p162
        %p291 = pneg %p159
        %p292 = pneg %p190
        %p293 = pneg %p187
        %s294 = sand.u32 %s177, 1
        %s295 = scalar_lea.sflag [#allocation8], %s294
        %s296 = sand.u32 %s177, 1
        %s297 = smul.addr %s296, 32
        %s298 = scalar_lea.vmem [#allocation11], %s297
        %p299 = scmp.lt.s32.totalorder %s27, 1
        %s300 = scalar_select %p299, %s27, 1
        %p301 = scmp.lt.s32.totalorder %s26, 0
        %s302 = scalar_select %p301, %s26, 0
        %s303 = smul.addr %s302, 4
        %s304 = smul.addr %s300, 4
        %s305 = sadd.s32 %s303, %s304
        %s306 = smul.addr %s305, 8
        %s307 = scalar_lea.vmem %s0, %s306
        %p308 = scmp.eq.s32.totalorder %s27, 0
        // Predicated region
        $region53: #{tpu_custom_call.1} parent=43 // pred_check
          %p309 = pneg %p308
        $region54: #{tpu_custom_call.1} parent=43 // pred_check_branch
          %311 = sbr.rel (%p309) target = $region56
        $region55: #{tpu_custom_call.1} parent=43 // pred_region
          %312 = vst [vmem:[#allocation2] sm:$0xff] 0.0
          %313 = vst [vmem:[#allocation3] sm:$0xff] 0.0
        $region56: #{tpu_custom_call.1} parent=43 // pred_fallthru
          _
        %v314 = vld [vmem:[%s307] sm:$0xff]
        %v315 = vld [vmem:[%s307 + $0x8] sm:$0xff]
        %v316 = vld [vmem:[%s307 + $0x10] sm:$0xff]
        %v317 = vld [vmem:[%s307 + $0x18] sm:$0xff]
        %v318 = vld [vmem:[%s1] sm:$0xff]
        %v319 = vld [vmem:[%s1 + $0x8] sm:$0xff]
        %v320 = vld [vmem:[%s1 + $0x10] sm:$0xff]
        %v321 = vld [vmem:[%s1 + $0x18] sm:$0xff]
        %v322 = vld [vmem:[%s1 + $0x20] sm:$0xff]
        %v323 = vld [vmem:[%s1 + $0x28] sm:$0xff]
        %v324 = vld [vmem:[%s1 + $0x30] sm:$0xff]
        %v325 = vld [vmem:[%s1 + $0x38] sm:$0xff]
        %v326 = vld [vmem:[%s3] sm:$0xf]
        %v328 = vlaneseq
        %v329 = vshrl.u32 %v328, 7
        %v330 = vsub.s32 0, %v329
        %v331 = vrot.slane %v326, %v330
        %v332 = vlaneseq
        %v333 = vshrl.u32 %v332, 7
        %v334 = vsub.s32 1, %v333
        %v335 = vrot.slane %v326, %v334
        %v336 = vlaneseq
        %v337 = vshrl.u32 %v336, 7
        %v338 = vsub.s32 2, %v337
        %v339 = vrot.slane %v326, %v338
        %v340 = vlaneseq
        %v341 = vshrl.u32 %v340, 7
        %v342 = vsub.s32 3, %v341
        %v343 = vrot.slane %v326, %v342
        %vm348 = vcmask 130048
        %v350 = vsel %vm348, %v314, 0
        %v353 = vsel %vm348, %v315, 0
        %v356 = vsel %vm348, %v316, 0
        %v359 = vsel %vm348, %v317, 0
        %361 = vmatprep.subr.mxu0 %v319
        %362 = vmatpush1.msra.mxu0 %v318
        %363 = vmatprep.subr.mxu0 %v323
        %364 = vmatpush1.msra.mxu0 %v322
        %365 = vmatprep.subr.mxu0 0.0
        %366 = vmatpush1.msra.mxu0 0.0
        %367 = vmatprep.subr.mxu0 0.0
        %368 = vmatpush1.msra.mxu0 0.0
        %369 = vmatprep.subr.mxu0 0.0
        %370 = vmatpush1.msra.mxu0 0.0
        %371 = vmatprep.subr.mxu0 0.0
        %372 = vmatpush1.msra.mxu0 0.0
        %373 = vmatprep.subr.mxu0 0.0
        %374 = vmatpush1.msra.mxu0 0.0
        %375 = vmatprep.subr.mxu0 0.0
        %376 = vmatpush1.msra.mxu0 0.0
        %377 = vmatprep.subr.mxu0 0.0
        %378 = vmatpush1.msra.mxu0 0.0
        %379 = vmatprep.subr.mxu0 0.0
        %380 = vmatpush1.msra.mxu0 0.0
        %381 = vmatprep.subr.mxu0 0.0
        %382 = vmatpush1.msra.mxu0 0.0
        %383 = vmatprep.subr.mxu0 0.0
        %384 = vmatpush1.msra.mxu0 0.0
        %385 = vmatprep.subr.mxu0 0.0
        %386 = vmatpush1.msra.mxu0 0.0
        %387 = vmatprep.subr.mxu0 0.0
        %388 = vmatpush1.msra.mxu0 0.0
        %389 = vmatprep.subr.mxu0 0.0
        %390 = vmatpush1.msra.mxu0 0.0
        %391 = vmatprep.subr.mxu0 0.0
        %392 = vmatpush1.msra.mxu0 0.0
        %393 = vmatprep.subr.mxu0 0.0
        %394 = vmatpush1.msra.mxu0 0.0
        %395 = vmatprep.subr.mxu0 0.0
        %396 = vmatpush1.msra.mxu0 0.0
        %397 = vmatprep.subr.mxu0 0.0
        %398 = vmatpush1.msra.mxu0 0.0
        %399 = vmatprep.subr.mxu0 0.0
        %400 = vmatpush1.msra.mxu0 0.0
        %401 = vmatprep.subr.mxu0 0.0
        %402 = vmatpush1.msra.mxu0 0.0
        %403 = vmatprep.subr.mxu0 0.0
        %404 = vmatpush1.msra.mxu0 0.0
        %405 = vmatprep.subr.mxu0 0.0
        %406 = vmatpush1.msra.mxu0 0.0
        %407 = vmatprep.subr.mxu0 0.0
        %408 = vmatpush1.msra.mxu0 0.0
        %409 = vmatprep.subr.mxu0 0.0
        %410 = vmatpush1.msra.mxu0 0.0
        %411 = vmatprep.subr.mxu0 0.0
        %412 = vmatpush1.msra.mxu0 0.0
        %413 = vmatprep.subr.mxu0 0.0
        %414 = vmatpush1.msra.mxu0 0.0
        %415 = vmatprep.subr.mxu0 0.0
        %416 = vmatpush1.msra.mxu0 0.0
        %417 = vmatprep.subr.mxu0 0.0
        %418 = vmatpush1.msra.mxu0 0.0
        %419 = vmatprep.subr.mxu0 0.0
        %420 = vmatpush1.msra.mxu0 0.0
        %421 = vmatprep.subr.mxu0 0.0
        %422 = vmatpush1.msra.mxu0 0.0
        %423 = vmatprep.subr.mxu0 0.0
        %424 = vmatpush1.msra.mxu0 0.0
        %425 = vmatprep.mubr.f32.mxu0 0.0
        %426 = vmatmul.mubr.f32.gmra.mrb[0].mxu0 %v350
        %v427 = vpop.f32.mrb[0].mxu0
        %v428 = vadd.f32 %v331, %v427
        %v429 = vpop.f32.mrb[0].mxu0
        %v430 = vadd.f32 %v335, %v429
        %431 = vmatprep.mubr.f32.mxu0 0.0
        %432 = vmatmul.mubr.f32.gmra.mrb[0].mxu0 %v353
        %v433 = vpop.f32.mrb[0].mxu0
        %v434 = vadd.f32 %v331, %v433
        %v435 = vpop.f32.mrb[0].mxu0
        %v436 = vadd.f32 %v335, %v435
        %437 = vmatprep.mubr.f32.mxu0 0.0
        %438 = vmatmul.mubr.f32.gmra.mrb[0].mxu0 %v356
        %v439 = vpop.f32.mrb[0].mxu0
        %v440 = vadd.f32 %v331, %v439
        %v441 = vpop.f32.mrb[0].mxu0
        %v442 = vadd.f32 %v335, %v441
        %443 = vmatprep.mubr.f32.mxu0 0.0
        %444 = vmatmul.mubr.f32.gmra.mrb[0].mxu0 %v359
        %v445 = vpop.f32.mrb[0].mxu0
        %v446 = vadd.f32 %v331, %v445
        %v447 = vpop.f32.mrb[0].mxu0
        %v448 = vadd.f32 %v335, %v447
        %449 = vdwg.mxu0
        %450 = vmatprep.subr.mxu0 %v321
        %451 = vmatpush1.msra.mxu0 %v320
        %452 = vmatprep.subr.mxu0 %v325
        %453 = vmatpush1.msra.mxu0 %v324
        %454 = vmatprep.subr.mxu0 0.0
        %455 = vmatpush1.msra.mxu0 0.0
        %456 = vmatprep.subr.mxu0 0.0
        %457 = vmatpush1.msra.mxu0 0.0
        %458 = vmatprep.subr.mxu0 0.0
        %459 = vmatpush1.msra.mxu0 0.0
        %460 = vmatprep.subr.mxu0 0.0
        %461 = vmatpush1.msra.mxu0 0.0
        %462 = vmatprep.subr.mxu0 0.0
        %463 = vmatpush1.msra.mxu0 0.0
        %464 = vmatprep.subr.mxu0 0.0
        %465 = vmatpush1.msra.mxu0 0.0
        %466 = vmatprep.subr.mxu0 0.0
        %467 = vmatpush1.msra.mxu0 0.0
        %468 = vmatprep.subr.mxu0 0.0
        %469 = vmatpush1.msra.mxu0 0.0
        %470 = vmatprep.subr.mxu0 0.0
        %471 = vmatpush1.msra.mxu0 0.0
        %472 = vmatprep.subr.mxu0 0.0
        %473 = vmatpush1.msra.mxu0 0.0
        %474 = vmatprep.subr.mxu0 0.0
        %475 = vmatpush1.msra.mxu0 0.0
        %476 = vmatprep.subr.mxu0 0.0
        %477 = vmatpush1.msra.mxu0 0.0
        %478 = vmatprep.subr.mxu0 0.0
        %479 = vmatpush1.msra.mxu0 0.0
        %480 = vmatprep.subr.mxu0 0.0
        %481 = vmatpush1.msra.mxu0 0.0
        %482 = vmatprep.subr.mxu0 0.0
        %483 = vmatpush1.msra.mxu0 0.0
        %484 = vmatprep.subr.mxu0 0.0
        %485 = vmatpush1.msra.mxu0 0.0
        %486 = vmatprep.subr.mxu0 0.0
        %487 = vmatpush1.msra.mxu0 0.0
        %488 = vmatprep.subr.mxu0 0.0
        %489 = vmatpush1.msra.mxu0 0.0
        %490 = vmatprep.subr.mxu0 0.0
        %491 = vmatpush1.msra.mxu0 0.0
        %492 = vmatprep.subr.mxu0 0.0
        %493 = vmatpush1.msra.mxu0 0.0
        %494 = vmatprep.subr.mxu0 0.0
        %495 = vmatpush1.msra.mxu0 0.0
        %496 = vmatprep.subr.mxu0 0.0
        %497 = vmatpush1.msra.mxu0 0.0
        %498 = vmatprep.subr.mxu0 0.0
        %499 = vmatpush1.msra.mxu0 0.0
        %500 = vmatprep.subr.mxu0 0.0
        %501 = vmatpush1.msra.mxu0 0.0
        %502 = vmatprep.subr.mxu0 0.0
        %503 = vmatpush1.msra.mxu0 0.0
        %504 = vmatprep.subr.mxu0 0.0
        %505 = vmatpush1.msra.mxu0 0.0
        %506 = vmatprep.subr.mxu0 0.0
        %507 = vmatpush1.msra.mxu0 0.0
        %508 = vmatprep.subr.mxu0 0.0
        %509 = vmatpush1.msra.mxu0 0.0
        %510 = vmatprep.subr.mxu0 0.0
        %511 = vmatpush1.msra.mxu0 0.0
        %512 = vmatprep.subr.mxu0 0.0
        %513 = vmatpush1.msra.mxu0 0.0
        %514 = vmatprep.mubr.f32.mxu0 0.0
        %515 = vmatmul.mubr.f32.gmra.mrb[0].mxu0 %v350
        %v516 = vpop.f32.mrb[0].mxu0
        %v517 = vadd.f32 %v339, %v516
        %v518 = vpop.f32.mrb[0].mxu0
        %v519 = vadd.f32 %v343, %v518
        %520 = vmatprep.mubr.f32.mxu0 0.0
        %521 = vmatmul.mubr.f32.gmra.mrb[0].mxu0 %v353
        %v522 = vpop.f32.mrb[0].mxu0
        %v523 = vadd.f32 %v339, %v522
        %v524 = vpop.f32.mrb[0].mxu0
        %v525 = vadd.f32 %v343, %v524
        %526 = vmatprep.mubr.f32.mxu0 0.0
        %527 = vmatmul.mubr.f32.gmra.mrb[0].mxu0 %v356
        %v528 = vpop.f32.mrb[0].mxu0
        %v529 = vadd.f32 %v339, %v528
        %v530 = vpop.f32.mrb[0].mxu0
        %v531 = vadd.f32 %v343, %v530
        %532 = vmatprep.mubr.f32.mxu0 0.0
        %533 = vmatmul.mubr.f32.gmra.mrb[0].mxu0 %v359
        %v534 = vpop.f32.mrb[0].mxu0
        %v535 = vadd.f32 %v339, %v534
        %v536 = vpop.f32.mrb[0].mxu0
        %v537 = vadd.f32 %v343, %v536
        %538 = vdwg.mxu0
        %539 = vst [vmem:[#allocation4] sm:$0xff] %v428
        %540 = vst [vmem:[#allocation4 + $0x8] sm:$0xff] %v430
        %541 = vst [vmem:[#allocation4 + $0x10] sm:$0xff] %v517
        %542 = vst [vmem:[#allocation4 + $0x18] sm:$0xff] %v519
        %543 = vst [vmem:[#allocation4 + $0x20] sm:$0xff] %v434
        %544 = vst [vmem:[#allocation4 + $0x28] sm:$0xff] %v436
        %545 = vst [vmem:[#allocation4 + $0x30] sm:$0xff] %v523
        %546 = vst [vmem:[#allocation4 + $0x38] sm:$0xff] %v525
        %547 = vst [vmem:[#allocation4 + $0x40] sm:$0xff] %v440
        %548 = vst [vmem:[#allocation4 + $0x48] sm:$0xff] %v442
        %549 = vst [vmem:[#allocation4 + $0x50] sm:$0xff] %v529
        %550 = vst [vmem:[#allocation4 + $0x58] sm:$0xff] %v531
        %551 = vst [vmem:[#allocation4 + $0x60] sm:$0xff] %v446
        %552 = vst [vmem:[#allocation4 + $0x68] sm:$0xff] %v448
        %553 = vst [vmem:[#allocation4 + $0x70] sm:$0xff] %v535
        %554 = vst [vmem:[#allocation4 + $0x78] sm:$0xff] %v537
        %v555 = vld [vmem:[#allocation4] sm:$0xff]
        %v556 = vld [vmem:[#allocation4 + $0x8] sm:$0xff]
        %v557 = vld [vmem:[#allocation4 + $0x10] sm:$0xff]
        %v558 = vld [vmem:[#allocation4 + $0x18] sm:$0xff]
        %v559 = vld [vmem:[#allocation2] sm:$0xff]
        %v560 = vld [vmem:[#allocation6] sm:$0xff]
        %v561 = vld [vmem:[#allocation6 + $0x8] sm:$0xff]
        %v562 = vld [vmem:[#allocation6 + $0x10] sm:$0xff]
        %v563 = vld [vmem:[#allocation6 + $0x18] sm:$0xff]
        %v564 = vld [vmem:[#allocation6 + $0x20] sm:$0xff]
        %v565 = vld [vmem:[#allocation6 + $0x28] sm:$0xff]
        %v566 = vld [vmem:[#allocation6 + $0x30] sm:$0xff]
        %v567 = vld [vmem:[#allocation6 + $0x38] sm:$0xff]
        %v568 = vld [vmem:[#allocation6 + $0x40] sm:$0xff]
        %v569 = vld [vmem:[#allocation6 + $0x48] sm:$0xff]
        %v570 = vld [vmem:[#allocation6 + $0x50] sm:$0xff]
        %v571 = vld [vmem:[#allocation6 + $0x58] sm:$0xff]
        %v572 = vld [vmem:[#allocation6 + $0x60] sm:$0xff]
        %v573 = vld [vmem:[#allocation6 + $0x68] sm:$0xff]
        %v574 = vld [vmem:[#allocation6 + $0x70] sm:$0xff]
        %v575 = vld [vmem:[#allocation6 + $0x78] sm:$0xff]
        %v576 = vld [vmem:[#allocation6 + $0x80] sm:$0xff]
        %v577 = vld [vmem:[#allocation6 + $0x88] sm:$0xff]
        %v578 = vld [vmem:[#allocation6 + $0x90] sm:$0xff]
        %v579 = vld [vmem:[#allocation6 + $0x98] sm:$0xff]
        %v580 = vld [vmem:[#allocation6 + $0xa0] sm:$0xff]
        %v581 = vld [vmem:[#allocation6 + $0xa8] sm:$0xff]
        %v582 = vld [vmem:[#allocation6 + $0xb0] sm:$0xff]
        %v583 = vld [vmem:[#allocation6 + $0xb8] sm:$0xff]
        %v584 = vld [vmem:[#allocation6 + $0xc0] sm:$0xff]
        %v585 = vld [vmem:[#allocation6 + $0xc8] sm:$0xff]
        %v586 = vld [vmem:[#allocation6 + $0xd0] sm:$0xff]
        %v587 = vld [vmem:[#allocation6 + $0xd8] sm:$0xff]
        %v588 = vld [vmem:[#allocation6 + $0xe0] sm:$0xff]
        %v589 = vld [vmem:[#allocation6 + $0xe8] sm:$0xff]
        %v590 = vld [vmem:[#allocation6 + $0xf0] sm:$0xff]
        %v591 = vld [vmem:[#allocation6 + $0xf8] sm:$0xff]
        %v592 = vld [vmem:[#allocation6 + $0x100] sm:$0xff]
        %v593 = vld [vmem:[#allocation6 + $0x108] sm:$0xff]
        %v594 = vld [vmem:[#allocation6 + $0x110] sm:$0xff]
        %v595 = vld [vmem:[#allocation6 + $0x118] sm:$0xff]
        %v596 = vld [vmem:[#allocation6 + $0x120] sm:$0xff]
        %v597 = vld [vmem:[#allocation6 + $0x128] sm:$0xff]
        %v598 = vld [vmem:[#allocation6 + $0x130] sm:$0xff]
        %v599 = vld [vmem:[#allocation6 + $0x138] sm:$0xff]
        %v600 = vld [vmem:[#allocation6 + $0x140] sm:$0xff]
        %v601 = vld [vmem:[#allocation6 + $0x148] sm:$0xff]
        %v602 = vld [vmem:[#allocation6 + $0x150] sm:$0xff]
        %v603 = vld [vmem:[#allocation6 + $0x158] sm:$0xff]
        %v604 = vld [vmem:[#allocation6 + $0x160] sm:$0xff]
        %v605 = vld [vmem:[#allocation6 + $0x168] sm:$0xff]
        %v606 = vld [vmem:[#allocation6 + $0x170] sm:$0xff]
        %v607 = vld [vmem:[#allocation6 + $0x178] sm:$0xff]
        %v608 = vld [vmem:[#allocation6 + $0x180] sm:$0xff]
        %v609 = vld [vmem:[#allocation6 + $0x188] sm:$0xff]
        %v610 = vld [vmem:[#allocation6 + $0x190] sm:$0xff]
        %v611 = vld [vmem:[#allocation6 + $0x198] sm:$0xff]
        %v612 = vld [vmem:[#allocation6 + $0x1a0] sm:$0xff]
        %v613 = vld [vmem:[#allocation6 + $0x1a8] sm:$0xff]
        %v614 = vld [vmem:[#allocation6 + $0x1b0] sm:$0xff]
        %v615 = vld [vmem:[#allocation6 + $0x1b8] sm:$0xff]
        %v616 = vld [vmem:[#allocation6 + $0x1c0] sm:$0xff]
        %v617 = vld [vmem:[#allocation6 + $0x1c8] sm:$0xff]
        %v618 = vld [vmem:[#allocation6 + $0x1d0] sm:$0xff]
        %v619 = vld [vmem:[#allocation6 + $0x1d8] sm:$0xff]
        %v620 = vld [vmem:[#allocation6 + $0x1e0] sm:$0xff]
        %v621 = vld [vmem:[#allocation6 + $0x1e8] sm:$0xff]
        %v622 = vld [vmem:[#allocation6 + $0x1f0] sm:$0xff]
        %v623 = vld [vmem:[#allocation6 + $0x1f8] sm:$0xff]
        %624 = vmatprep.subr.mxu0 %v561
        %625 = vmatpush1.msra.mxu0 %v560
        %626 = vmatprep.subr.mxu0 %v565
        %627 = vmatpush1.msra.mxu0 %v564
        %628 = vmatprep.subr.mxu0 %v569
        %629 = vmatpush1.msra.mxu0 %v568
        %630 = vmatprep.subr.mxu0 %v573
        %631 = vmatpush1.msra.mxu0 %v572
        %632 = vmatprep.subr.mxu0 %v577
        %633 = vmatpush1.msra.mxu0 %v576
        %634 = vmatprep.subr.mxu0 %v581
        %635 = vmatpush1.msra.mxu0 %v580
        %636 = vmatprep.subr.mxu0 %v585
        %637 = vmatpush1.msra.mxu0 %v584
        %638 = vmatprep.subr.mxu0 %v589
        %639 = vmatpush1.msra.mxu0 %v588
        %640 = vmatprep.subr.mxu0 %v593
        %641 = vmatpush1.msra.mxu0 %v592
        %642 = vmatprep.subr.mxu0 %v597
        %643 = vmatpush1.msra.mxu0 %v596
        %644 = vmatprep.subr.mxu0 %v601
        %645 = vmatpush1.msra.mxu0 %v600
        %646 = vmatprep.subr.mxu0 %v605
        %647 = vmatpush1.msra.mxu0 %v604
        %648 = vmatprep.subr.mxu0 %v609
        %649 = vmatpush1.msra.mxu0 %v608
        %650 = vmatprep.subr.mxu0 %v613
        %651 = vmatpush1.msra.mxu0 %v612
        %652 = vmatprep.subr.mxu0 %v617
        %653 = vmatpush1.msra.mxu0 %v616
        %654 = vmatprep.subr.mxu0 %v621
        %655 = vmatpush1.msra.mxu0 %v620
        %656 = vmatprep.subr.mxu0 0.0
        %657 = vmatpush1.msra.mxu0 0.0
        %658 = vmatprep.subr.mxu0 0.0
        %659 = vmatpush1.msra.mxu0 0.0
        %660 = vmatprep.subr.mxu0 0.0
        %661 = vmatpush1.msra.mxu0 0.0
        %662 = vmatprep.subr.mxu0 0.0
        %663 = vmatpush1.msra.mxu0 0.0
        %664 = vmatprep.subr.mxu0 0.0
        %665 = vmatpush1.msra.mxu0 0.0
        %666 = vmatprep.subr.mxu0 0.0
        %667 = vmatpush1.msra.mxu0 0.0
        %668 = vmatprep.subr.mxu0 0.0
        %669 = vmatpush1.msra.mxu0 0.0
        %670 = vmatprep.subr.mxu0 0.0
        %671 = vmatpush1.msra.mxu0 0.0
        %672 = vmatprep.subr.mxu0 0.0
        %673 = vmatpush1.msra.mxu0 0.0
        %674 = vmatprep.subr.mxu0 0.0
        %675 = vmatpush1.msra.mxu0 0.0
        %676 = vmatprep.subr.mxu0 0.0
        %677 = vmatpush1.msra.mxu0 0.0
        %678 = vmatprep.subr.mxu0 0.0
        %679 = vmatpush1.msra.mxu0 0.0
        %680 = vmatprep.subr.mxu0 0.0
        %681 = vmatpush1.msra.mxu0 0.0
        %682 = vmatprep.subr.mxu0 0.0
        %683 = vmatpush1.msra.mxu0 0.0
        %684 = vmatprep.subr.mxu0 0.0
        %685 = vmatpush1.msra.mxu0 0.0
        %686 = vmatprep.subr.mxu0 0.0
        %687 = vmatpush1.msra.mxu0 0.0
        %688 = vmatprep.mubr.f32.mxu0 0.0
        %689 = vmatmul.mubr.f32.gmra.mrb[0].mxu0 %v559
        %v690 = vpop.f32.mrb[0].mxu0
        %v691 = vadd.f32 0.0, %v690
        %v692 = vpop.f32.mrb[0].mxu0
        %v693 = vadd.f32 0.0, %v692
        %694 = vdwg.mxu0
        %695 = vmatprep.subr.mxu0 %v563
        %696 = vmatpush1.msra.mxu0 %v562
        %697 = vmatprep.subr.mxu0 %v567
        %698 = vmatpush1.msra.mxu0 %v566
        %699 = vmatprep.subr.mxu0 %v571
        %700 = vmatpush1.msra.mxu0 %v570
        %701 = vmatprep.subr.mxu0 %v575
        %702 = vmatpush1.msra.mxu0 %v574
        %703 = vmatprep.subr.mxu0 %v579
        %704 = vmatpush1.msra.mxu0 %v578
        %705 = vmatprep.subr.mxu0 %v583
        %706 = vmatpush1.msra.mxu0 %v582
        %707 = vmatprep.subr.mxu0 %v587
        %708 = vmatpush1.msra.mxu0 %v586
        %709 = vmatprep.subr.mxu0 %v591
        %710 = vmatpush1.msra.mxu0 %v590
        %711 = vmatprep.subr.mxu0 %v595
        %712 = vmatpush1.msra.mxu0 %v594
        %713 = vmatprep.subr.mxu0 %v599
        %714 = vmatpush1.msra.mxu0 %v598
        %715 = vmatprep.subr.mxu0 %v603
        %716 = vmatpush1.msra.mxu0 %v602
        %717 = vmatprep.subr.mxu0 %v607
        %718 = vmatpush1.msra.mxu0 %v606
        %719 = vmatprep.subr.mxu0 %v611
        %720 = vmatpush1.msra.mxu0 %v610
        %721 = vmatprep.subr.mxu0 %v615
        %722 = vmatpush1.msra.mxu0 %v614
        %723 = vmatprep.subr.mxu0 %v619
        %724 = vmatpush1.msra.mxu0 %v618
        %725 = vmatprep.subr.mxu0 %v623
        %726 = vmatpush1.msra.mxu0 %v622
        %727 = vmatprep.subr.mxu0 0.0
        %728 = vmatpush1.msra.mxu0 0.0
        %729 = vmatprep.subr.mxu0 0.0
        %730 = vmatpush1.msra.mxu0 0.0
        %731 = vmatprep.subr.mxu0 0.0
        %732 = vmatpush1.msra.mxu0 0.0
        %733 = vmatprep.subr.mxu0 0.0
        %734 = vmatpush1.msra.mxu0 0.0
        %735 = vmatprep.subr.mxu0 0.0
        %736 = vmatpush1.msra.mxu0 0.0
        %737 = vmatprep.subr.mxu0 0.0
        %738 = vmatpush1.msra.mxu0 0.0
        %739 = vmatprep.subr.mxu0 0.0
        %740 = vmatpush1.msra.mxu0 0.0
        %741 = vmatprep.subr.mxu0 0.0
        %742 = vmatpush1.msra.mxu0 0.0
        %743 = vmatprep.subr.mxu0 0.0
        %744 = vmatpush1.msra.mxu0 0.0
        %745 = vmatprep.subr.mxu0 0.0
        %746 = vmatpush1.msra.mxu0 0.0
        %747 = vmatprep.subr.mxu0 0.0
        %748 = vmatpush1.msra.mxu0 0.0
        %749 = vmatprep.subr.mxu0 0.0
        %750 = vmatpush1.msra.mxu0 0.0
        %751 = vmatprep.subr.mxu0 0.0
        %752 = vmatpush1.msra.mxu0 0.0
        %753 = vmatprep.subr.mxu0 0.0
        %754 = vmatpush1.msra.mxu0 0.0
        %755 = vmatprep.subr.mxu0 0.0
        %756 = vmatpush1.msra.mxu0 0.0
        %757 = vmatprep.subr.mxu0 0.0
        %758 = vmatpush1.msra.mxu0 0.0
        %759 = vmatprep.mubr.f32.mxu0 0.0
        %760 = vmatmul.mubr.f32.gmra.mrb[0].mxu0 %v559
        %v761 = vpop.f32.mrb[0].mxu0
        %v762 = vadd.f32 0.0, %v761
        %v763 = vpop.f32.mrb[0].mxu0
        %v764 = vadd.f32 0.0, %v763
        %765 = vdwg.mxu0
        %v766 = vadd.f32 %v555, %v691
        %v767 = vadd.f32 %v556, %v693
        %v768 = vadd.f32 %v557, %v762
        %v769 = vadd.f32 %v558, %v764
        %v770 = vxor.u32 %v766, 2147483648
        %v771 = vmul.f32 %v770, 1.442695
        %v772 = vpow.pop %v771
        %v773 = vadd.f32 %v772, 1.0
        %v774 = vrcp.pop %v773
        %v775 = vmul.f32 1.0, %v774
        %v776 = vxor.u32 %v767, 2147483648
        %v777 = vmul.f32 %v776, 1.442695
        %v778 = vpow.pop %v777
        %v779 = vadd.f32 %v778, 1.0
        %v780 = vrcp.pop %v779
        %v781 = vmul.f32 1.0, %v780
        %v782 = vtanh.pop %v768
        %v783 = vxor.u32 %v769, 2147483648
        %v784 = vmul.f32 %v783, 1.442695
        %v785 = vpow.pop %v784
        %v786 = vadd.f32 %v785, 1.0
        %v787 = vrcp.pop %v786
        %v788 = vmul.f32 1.0, %v787
        %v789 = vld [vmem:[#allocation3] sm:$0xff]
        %v790 = vmul.f32 %v781, %v789
        %v791 = vmul.f32 %v775, %v782
        %v792 = vadd.f32 %v790, %v791
        %v793 = vtanh.pop %v792
        %v794 = vmul.f32 %v788, %v793
        %795 = vst [vmem:[#allocation3] sm:$0xff] %v792
        %796 = vst [vmem:[#allocation2] sm:$0xff] %v794
        %797 = vst [vmem:[#allocation5] sm:$0xff] %v794
        %v798 = vld [vmem:[#allocation4 + $0x20] sm:$0xff]
        %v799 = vld [vmem:[#allocation4 + $0x28] sm:$0xff]
        %v800 = vld [vmem:[#allocation4 + $0x30] sm:$0xff]
        %v801 = vld [vmem:[#allocation4 + $0x38] sm:$0xff]
        %v802 = vld [vmem:[#allocation2] sm:$0xff]
        %v803 = vld [vmem:[#allocation6] sm:$0xff]
        %v804 = vld [vmem:[#allocation6 + $0x8] sm:$0xff]
        %v805 = vld [vmem:[#allocation6 + $0x10] sm:$0xff]
        %v806 = vld [vmem:[#allocation6 + $0x18] sm:$0xff]
        %v807 = vld [vmem:[#allocation6 + $0x20] sm:$0xff]
        %v808 = vld [vmem:[#allocation6 + $0x28] sm:$0xff]
        %v809 = vld [vmem:[#allocation6 + $0x30] sm:$0xff]
        %v810 = vld [vmem:[#allocation6 + $0x38] sm:$0xff]
        %v811 = vld [vmem:[#allocation6 + $0x40] sm:$0xff]
        %v812 = vld [vmem:[#allocation6 + $0x48] sm:$0xff]
        %v813 = vld [vmem:[#allocation6 + $0x50] sm:$0xff]
        %v814 = vld [vmem:[#allocation6 + $0x58] sm:$0xff]
        %v815 = vld [vmem:[#allocation6 + $0x60] sm:$0xff]
        %v816 = vld [vmem:[#allocation6 + $0x68] sm:$0xff]
        %v817 = vld [vmem:[#allocation6 + $0x70] sm:$0xff]
        %v818 = vld [vmem:[#allocation6 + $0x78] sm:$0xff]
        %v819 = vld [vmem:[#allocation6 + $0x80] sm:$0xff]
        %v820 = vld [vmem:[#allocation6 + $0x88] sm:$0xff]
        %v821 = vld [vmem:[#allocation6 + $0x90] sm:$0xff]
        %v822 = vld [vmem:[#allocation6 + $0x98] sm:$0xff]
        %v823 = vld [vmem:[#allocation6 + $0xa0] sm:$0xff]
        %v824 = vld [vmem:[#allocation6 + $0xa8] sm:$0xff]
        %v825 = vld [vmem:[#allocation6 + $0xb0] sm:$0xff]
        %v826 = vld [vmem:[#allocation6 + $0xb8] sm:$0xff]
        %v827 = vld [vmem:[#allocation6 + $0xc0] sm:$0xff]
        %v828 = vld [vmem:[#allocation6 + $0xc8] sm:$0xff]
        %v829 = vld [vmem:[#allocation6 + $0xd0] sm:$0xff]
        %v830 = vld [vmem:[#allocation6 + $0xd8] sm:$0xff]
        %v831 = vld [vmem:[#allocation6 + $0xe0] sm:$0xff]
        %v832 = vld [vmem:[#allocation6 + $0xe8] sm:$0xff]
        %v833 = vld [vmem:[#allocation6 + $0xf0] sm:$0xff]
        %v834 = vld [vmem:[#allocation6 + $0xf8] sm:$0xff]
        %v835 = vld [vmem:[#allocation6 + $0x100] sm:$0xff]
        %v836 = vld [vmem:[#allocation6 + $0x108] sm:$0xff]
        %v837 = vld [vmem:[#allocation6 + $0x110] sm:$0xff]
        %v838 = vld [vmem:[#allocation6 + $0x118] sm:$0xff]
        %v839 = vld [vmem:[#allocation6 + $0x120] sm:$0xff]
        %v840 = vld [vmem:[#allocation6 + $0x128] sm:$0xff]
        %v841 = vld [vmem:[#allocation6 + $0x130] sm:$0xff]
        %v842 = vld [vmem:[#allocation6 + $0x138] sm:$0xff]
        %v843 = vld [vmem:[#allocation6 + $0x140] sm:$0xff]
        %v844 = vld [vmem:[#allocation6 + $0x148] sm:$0xff]
        %v845 = vld [vmem:[#allocation6 + $0x150] sm:$0xff]
        %v846 = vld [vmem:[#allocation6 + $0x158] sm:$0xff]
        %v847 = vld [vmem:[#allocation6 + $0x160] sm:$0xff]
        %v848 = vld [vmem:[#allocation6 + $0x168] sm:$0xff]
        %v849 = vld [vmem:[#allocation6 + $0x170] sm:$0xff]
        %v850 = vld [vmem:[#allocation6 + $0x178] sm:$0xff]
        %v851 = vld [vmem:[#allocation6 + $0x180] sm:$0xff]
        %v852 = vld [vmem:[#allocation6 + $0x188] sm:$0xff]
        %v853 = vld [vmem:[#allocation6 + $0x190] sm:$0xff]
        %v854 = vld [vmem:[#allocation6 + $0x198] sm:$0xff]
        %v855 = vld [vmem:[#allocation6 + $0x1a0] sm:$0xff]
        %v856 = vld [vmem:[#allocation6 + $0x1a8] sm:$0xff]
        %v857 = vld [vmem:[#allocation6 + $0x1b0] sm:$0xff]
        %v858 = vld [vmem:[#allocation6 + $0x1b8] sm:$0xff]
        %v859 = vld [vmem:[#allocation6 + $0x1c0] sm:$0xff]
        %v860 = vld [vmem:[#allocation6 + $0x1c8] sm:$0xff]
        %v861 = vld [vmem:[#allocation6 + $0x1d0] sm:$0xff]
        %v862 = vld [vmem:[#allocation6 + $0x1d8] sm:$0xff]
        %v863 = vld [vmem:[#allocation6 + $0x1e0] sm:$0xff]
        %v864 = vld [vmem:[#allocation6 + $0x1e8] sm:$0xff]
        %v865 = vld [vmem:[#allocation6 + $0x1f0] sm:$0xff]
        %v866 = vld [vmem:[#allocation6 + $0x1f8] sm:$0xff]
        %867 = vmatprep.subr.mxu0 %v804
        %868 = vmatpush1.msra.mxu0 %v803
        %869 = vmatprep.subr.mxu0 %v808
        %870 = vmatpush1.msra.mxu0 %v807
        %871 = vmatprep.subr.mxu0 %v812
        %872 = vmatpush1.msra.mxu0 %v811
        %873 = vmatprep.subr.mxu0 %v816
        %874 = vmatpush1.msra.mxu0 %v815
        %875 = vmatprep.subr.mxu0 %v820
        %876 = vmatpush1.msra.mxu0 %v819
        %877 = vmatprep.subr.mxu0 %v824
        %878 = vmatpush1.msra.mxu0 %v823
        %879 = vmatprep.subr.mxu0 %v828
        %880 = vmatpush1.msra.mxu0 %v827
        %881 = vmatprep.subr.mxu0 %v832
        %882 = vmatpush1.msra.mxu0 %v831
        %883 = vmatprep.subr.mxu0 %v836
        %884 = vmatpush1.msra.mxu0 %v835
        %885 = vmatprep.subr.mxu0 %v840
        %886 = vmatpush1.msra.mxu0 %v839
        %887 = vmatprep.subr.mxu0 %v844
        %888 = vmatpush1.msra.mxu0 %v843
        %889 = vmatprep.subr.mxu0 %v848
        %890 = vmatpush1.msra.mxu0 %v847
        %891 = vmatprep.subr.mxu0 %v852
        %892 = vmatpush1.msra.mxu0 %v851
        %893 = vmatprep.subr.mxu0 %v856
        %894 = vmatpush1.msra.mxu0 %v855
        %895 = vmatprep.subr.mxu0 %v860
        %896 = vmatpush1.msra.mxu0 %v859
        %897 = vmatprep.subr.mxu0 %v864
        %898 = vmatpush1.msra.mxu0 %v863
        %899 = vmatprep.subr.mxu0 0.0
        %900 = vmatpush1.msra.mxu0 0.0
        %901 = vmatprep.subr.mxu0 0.0
        %902 = vmatpush1.msra.mxu0 0.0
        %903 = vmatprep.subr.mxu0 0.0
        %904 = vmatpush1.msra.mxu0 0.0
        %905 = vmatprep.subr.mxu0 0.0
        %906 = vmatpush1.msra.mxu0 0.0
        %907 = vmatprep.subr.mxu0 0.0
        %908 = vmatpush1.msra.mxu0 0.0
        %909 = vmatprep.subr.mxu0 0.0
        %910 = vmatpush1.msra.mxu0 0.0
        %911 = vmatprep.subr.mxu0 0.0
        %912 = vmatpush1.msra.mxu0 0.0
        %913 = vmatprep.subr.mxu0 0.0
        %914 = vmatpush1.msra.mxu0 0.0
        %915 = vmatprep.subr.mxu0 0.0
        %916 = vmatpush1.msra.mxu0 0.0
        %917 = vmatprep.subr.mxu0 0.0
        %918 = vmatpush1.msra.mxu0 0.0
        %919 = vmatprep.subr.mxu0 0.0
        %920 = vmatpush1.msra.mxu0 0.0
        %921 = vmatprep.subr.mxu0 0.0
        %922 = vmatpush1.msra.mxu0 0.0
        %923 = vmatprep.subr.mxu0 0.0
        %924 = vmatpush1.msra.mxu0 0.0
        %925 = vmatprep.subr.mxu0 0.0
        %926 = vmatpush1.msra.mxu0 0.0
        %927 = vmatprep.subr.mxu0 0.0
        %928 = vmatpush1.msra.mxu0 0.0
        %929 = vmatprep.subr.mxu0 0.0
        %930 = vmatpush1.msra.mxu0 0.0
        %931 = vmatprep.mubr.f32.mxu0 0.0
        %932 = vmatmul.mubr.f32.gmra.mrb[0].mxu0 %v802
        %v933 = vpop.f32.mrb[0].mxu0
        %v934 = vadd.f32 0.0, %v933
        %v935 = vpop.f32.mrb[0].mxu0
        %v936 = vadd.f32 0.0, %v935
        %937 = vdwg.mxu0
        %938 = vmatprep.subr.mxu0 %v806
        %939 = vmatpush1.msra.mxu0 %v805
        %940 = vmatprep.subr.mxu0 %v810
        %941 = vmatpush1.msra.mxu0 %v809
        %942 = vmatprep.subr.mxu0 %v814
        %943 = vmatpush1.msra.mxu0 %v813
        %944 = vmatprep.subr.mxu0 %v818
        %945 = vmatpush1.msra.mxu0 %v817
        %946 = vmatprep.subr.mxu0 %v822
        %947 = vmatpush1.msra.mxu0 %v821
        %948 = vmatprep.subr.mxu0 %v826
        %949 = vmatpush1.msra.mxu0 %v825
        %950 = vmatprep.subr.mxu0 %v830
        %951 = vmatpush1.msra.mxu0 %v829
        %952 = vmatprep.subr.mxu0 %v834
        %953 = vmatpush1.msra.mxu0 %v833
        %954 = vmatprep.subr.mxu0 %v838
        %955 = vmatpush1.msra.mxu0 %v837
        %956 = vmatprep.subr.mxu0 %v842
        %957 = vmatpush1.msra.mxu0 %v841
        %958 = vmatprep.subr.mxu0 %v846
        %959 = vmatpush1.msra.mxu0 %v845
        %960 = vmatprep.subr.mxu0 %v850
        %961 = vmatpush1.msra.mxu0 %v849
        %962 = vmatprep.subr.mxu0 %v854
        %963 = vmatpush1.msra.mxu0 %v853
        %964 = vmatprep.subr.mxu0 %v858
        %965 = vmatpush1.msra.mxu0 %v857
        %966 = vmatprep.subr.mxu0 %v862
        %967 = vmatpush1.msra.mxu0 %v861
        %968 = vmatprep.subr.mxu0 %v866
        %969 = vmatpush1.msra.mxu0 %v865
        %970 = vmatprep.subr.mxu0 0.0
        %971 = vmatpush1.msra.mxu0 0.0
        %972 = vmatprep.subr.mxu0 0.0
        %973 = vmatpush1.msra.mxu0 0.0
        %974 = vmatprep.subr.mxu0 0.0
        %975 = vmatpush1.msra.mxu0 0.0
        %976 = vmatprep.subr.mxu0 0.0
        %977 = vmatpush1.msra.mxu0 0.0
        %978 = vmatprep.subr.mxu0 0.0
        %979 = vmatpush1.msra.mxu0 0.0
        %980 = vmatprep.subr.mxu0 0.0
        %981 = vmatpush1.msra.mxu0 0.0
        %982 = vmatprep.subr.mxu0 0.0
        %983 = vmatpush1.msra.mxu0 0.0
        %984 = vmatprep.subr.mxu0 0.0
        %985 = vmatpush1.msra.mxu0 0.0
        %986 = vmatprep.subr.mxu0 0.0
        %987 = vmatpush1.msra.mxu0 0.0
        %988 = vmatprep.subr.mxu0 0.0
        %989 = vmatpush1.msra.mxu0 0.0
        %990 = vmatprep.subr.mxu0 0.0
        %991 = vmatpush1.msra.mxu0 0.0
        %992 = vmatprep.subr.mxu0 0.0
        %993 = vmatpush1.msra.mxu0 0.0
        %994 = vmatprep.subr.mxu0 0.0
        %995 = vmatpush1.msra.mxu0 0.0
        %996 = vmatprep.subr.mxu0 0.0
        %997 = vmatpush1.msra.mxu0 0.0
        %998 = vmatprep.subr.mxu0 0.0
        %999 = vmatpush1.msra.mxu0 0.0
        %1000 = vmatprep.subr.mxu0 0.0
        %1001 = vmatpush1.msra.mxu0 0.0
        %1002 = vmatprep.mubr.f32.mxu0 0.0
        %1003 = vmatmul.mubr.f32.gmra.mrb[0].mxu0 %v802
        %v1004 = vpop.f32.mrb[0].mxu0
        %v1005 = vadd.f32 0.0, %v1004
        %v1006 = vpop.f32.mrb[0].mxu0
        %v1007 = vadd.f32 0.0, %v1006
        %1008 = vdwg.mxu0
        %v1009 = vadd.f32 %v798, %v934
        %v1010 = vadd.f32 %v799, %v936
        %v1011 = vadd.f32 %v800, %v1005
        %v1012 = vadd.f32 %v801, %v1007
        %v1013 = vxor.u32 %v1009, 2147483648
        %v1014 = vmul.f32 %v1013, 1.442695
        %v1015 = vpow.pop %v1014
        %v1016 = vadd.f32 %v1015, 1.0
        %v1017 = vrcp.pop %v1016
        %v1018 = vmul.f32 1.0, %v1017
        %v1019 = vxor.u32 %v1010, 2147483648
        %v1020 = vmul.f32 %v1019, 1.442695
        %v1021 = vpow.pop %v1020
        %v1022 = vadd.f32 %v1021, 1.0
        %v1023 = vrcp.pop %v1022
        %v1024 = vmul.f32 1.0, %v1023
        %v1025 = vtanh.pop %v1011
        %v1026 = vxor.u32 %v1012, 2147483648
        %v1027 = vmul.f32 %v1026, 1.442695
        %v1028 = vpow.pop %v1027
        %v1029 = vadd.f32 %v1028, 1.0
        %v1030 = vrcp.pop %v1029
        %v1031 = vmul.f32 1.0, %v1030
        %v1032 = vld [vmem:[#allocation3] sm:$0xff]
        %v1033 = vmul.f32 %v1024, %v1032
        %v1034 = vmul.f32 %v1018, %v1025
        %v1035 = vadd.f32 %v1033, %v1034
        %v1036 = vtanh.pop %v1035
        %v1037 = vmul.f32 %v1031, %v1036
        %1038 = vst [vmem:[#allocation3] sm:$0xff] %v1035
        %1039 = vst [vmem:[#allocation2] sm:$0xff] %v1037
        %1040 = vst [vmem:[#allocation5 + $0x8] sm:$0xff] %v1037
        %v1041 = vld [vmem:[#allocation4 + $0x40] sm:$0xff]
        %v1042 = vld [vmem:[#allocation4 + $0x48] sm:$0xff]
        %v1043 = vld [vmem:[#allocation4 + $0x50] sm:$0xff]
        %v1044 = vld [vmem:[#allocation4 + $0x58] sm:$0xff]
        %v1045 = vld [vmem:[#allocation2] sm:$0xff]
        %v1046 = vld [vmem:[#allocation6] sm:$0xff]
        %v1047 = vld [vmem:[#allocation6 + $0x8] sm:$0xff]
        %v1048 = vld [vmem:[#allocation6 + $0x10] sm:$0xff]
        %v1049 = vld [vmem:[#allocation6 + $0x18] sm:$0xff]
        %v1050 = vld [vmem:[#allocation6 + $0x20] sm:$0xff]
        %v1051 = vld [vmem:[#allocation6 + $0x28] sm:$0xff]
        %v1052 = vld [vmem:[#allocation6 + $0x30] sm:$0xff]
        %v1053 = vld [vmem:[#allocation6 + $0x38] sm:$0xff]
        %v1054 = vld [vmem:[#allocation6 + $0x40] sm:$0xff]
        %v1055 = vld [vmem:[#allocation6 + $0x48] sm:$0xff]
        %v1056 = vld [vmem:[#allocation6 + $0x50] sm:$0xff]
        %v1057 = vld [vmem:[#allocation6 + $0x58] sm:$0xff]
        %v1058 = vld [vmem:[#allocation6 + $0x60] sm:$0xff]
        %v1059 = vld [vmem:[#allocation6 + $0x68] sm:$0xff]
        %v1060 = vld [vmem:[#allocation6 + $0x70] sm:$0xff]
        %v1061 = vld [vmem:[#allocation6 + $0x78] sm:$0xff]
        %v1062 = vld [vmem:[#allocation6 + $0x80] sm:$0xff]
        %v1063 = vld [vmem:[#allocation6 + $0x88] sm:$0xff]
        %v1064 = vld [vmem:[#allocation6 + $0x90] sm:$0xff]
        %v1065 = vld [vmem:[#allocation6 + $0x98] sm:$0xff]
        %v1066 = vld [vmem:[#allocation6 + $0xa0] sm:$0xff]
        %v1067 = vld [vmem:[#allocation6 + $0xa8] sm:$0xff]
        %v1068 = vld [vmem:[#allocation6 + $0xb0] sm:$0xff]
        %v1069 = vld [vmem:[#allocation6 + $0xb8] sm:$0xff]
        %v1070 = vld [vmem:[#allocation6 + $0xc0] sm:$0xff]
        %v1071 = vld [vmem:[#allocation6 + $0xc8] sm:$0xff]
        %v1072 = vld [vmem:[#allocation6 + $0xd0] sm:$0xff]
        %v1073 = vld [vmem:[#allocation6 + $0xd8] sm:$0xff]
        %v1074 = vld [vmem:[#allocation6 + $0xe0] sm:$0xff]
        %v1075 = vld [vmem:[#allocation6 + $0xe8] sm:$0xff]
        %v1076 = vld [vmem:[#allocation6 + $0xf0] sm:$0xff]
        %v1077 = vld [vmem:[#allocation6 + $0xf8] sm:$0xff]
        %v1078 = vld [vmem:[#allocation6 + $0x100] sm:$0xff]
        %v1079 = vld [vmem:[#allocation6 + $0x108] sm:$0xff]
        %v1080 = vld [vmem:[#allocation6 + $0x110] sm:$0xff]
        %v1081 = vld [vmem:[#allocation6 + $0x118] sm:$0xff]
        %v1082 = vld [vmem:[#allocation6 + $0x120] sm:$0xff]
        %v1083 = vld [vmem:[#allocation6 + $0x128] sm:$0xff]
        %v1084 = vld [vmem:[#allocation6 + $0x130] sm:$0xff]
        %v1085 = vld [vmem:[#allocation6 + $0x138] sm:$0xff]
        %v1086 = vld [vmem:[#allocation6 + $0x140] sm:$0xff]
        %v1087 = vld [vmem:[#allocation6 + $0x148] sm:$0xff]
        %v1088 = vld [vmem:[#allocation6 + $0x150] sm:$0xff]
        %v1089 = vld [vmem:[#allocation6 + $0x158] sm:$0xff]
        %v1090 = vld [vmem:[#allocation6 + $0x160] sm:$0xff]
        %v1091 = vld [vmem:[#allocation6 + $0x168] sm:$0xff]
        %v1092 = vld [vmem:[#allocation6 + $0x170] sm:$0xff]
        %v1093 = vld [vmem:[#allocation6 + $0x178] sm:$0xff]
        %v1094 = vld [vmem:[#allocation6 + $0x180] sm:$0xff]
        %v1095 = vld [vmem:[#allocation6 + $0x188] sm:$0xff]
        %v1096 = vld [vmem:[#allocation6 + $0x190] sm:$0xff]
        %v1097 = vld [vmem:[#allocation6 + $0x198] sm:$0xff]
        %v1098 = vld [vmem:[#allocation6 + $0x1a0] sm:$0xff]
        %v1099 = vld [vmem:[#allocation6 + $0x1a8] sm:$0xff]
        %v1100 = vld [vmem:[#allocation6 + $0x1b0] sm:$0xff]
        %v1101 = vld [vmem:[#allocation6 + $0x1b8] sm:$0xff]
        %v1102 = vld [vmem:[#allocation6 + $0x1c0] sm:$0xff]
        %v1103 = vld [vmem:[#allocation6 + $0x1c8] sm:$0xff]
        %v1104 = vld [vmem:[#allocation6 + $0x1d0] sm:$0xff]
        %v1105 = vld [vmem:[#allocation6 + $0x1d8] sm:$0xff]
        %v1106 = vld [vmem:[#allocation6 + $0x1e0] sm:$0xff]
        %v1107 = vld [vmem:[#allocation6 + $0x1e8] sm:$0xff]
        %v1108 = vld [vmem:[#allocation6 + $0x1f0] sm:$0xff]
        %v1109 = vld [vmem:[#allocation6 + $0x1f8] sm:$0xff]
        %1110 = vmatprep.subr.mxu0 %v1047
        %1111 = vmatpush1.msra.mxu0 %v1046
        %1112 = vmatprep.subr.mxu0 %v1051
        %1113 = vmatpush1.msra.mxu0 %v1050
        %1114 = vmatprep.subr.mxu0 %v1055
        %1115 = vmatpush1.msra.mxu0 %v1054
        %1116 = vmatprep.subr.mxu0 %v1059
        %1117 = vmatpush1.msra.mxu0 %v1058
        %1118 = vmatprep.subr.mxu0 %v1063
        %1119 = vmatpush1.msra.mxu0 %v1062
        %1120 = vmatprep.subr.mxu0 %v1067
        %1121 = vmatpush1.msra.mxu0 %v1066
        %1122 = vmatprep.subr.mxu0 %v1071
        %1123 = vmatpush1.msra.mxu0 %v1070
        %1124 = vmatprep.subr.mxu0 %v1075
        %1125 = vmatpush1.msra.mxu0 %v1074
        %1126 = vmatprep.subr.mxu0 %v1079
        %1127 = vmatpush1.msra.mxu0 %v1078
        %1128 = vmatprep.subr.mxu0 %v1083
        %1129 = vmatpush1.msra.mxu0 %v1082
        %1130 = vmatprep.subr.mxu0 %v1087
        %1131 = vmatpush1.msra.mxu0 %v1086
        %1132 = vmatprep.subr.mxu0 %v1091
        %1133 = vmatpush1.msra.mxu0 %v1090
        %1134 = vmatprep.subr.mxu0 %v1095
        %1135 = vmatpush1.msra.mxu0 %v1094
        %1136 = vmatprep.subr.mxu0 %v1099
        %1137 = vmatpush1.msra.mxu0 %v1098
        %1138 = vmatprep.subr.mxu0 %v1103
        %1139 = vmatpush1.msra.mxu0 %v1102
        %1140 = vmatprep.subr.mxu0 %v1107
        %1141 = vmatpush1.msra.mxu0 %v1106
        %1142 = vmatprep.subr.mxu0 0.0
        %1143 = vmatpush1.msra.mxu0 0.0
        %1144 = vmatprep.subr.mxu0 0.0
        %1145 = vmatpush1.msra.mxu0 0.0
        %1146 = vmatprep.subr.mxu0 0.0
        %1147 = vmatpush1.msra.mxu0 0.0
        %1148 = vmatprep.subr.mxu0 0.0
        %1149 = vmatpush1.msra.mxu0 0.0
        %1150 = vmatprep.subr.mxu0 0.0
        %1151 = vmatpush1.msra.mxu0 0.0
        %1152 = vmatprep.subr.mxu0 0.0
        %1153 = vmatpush1.msra.mxu0 0.0
        %1154 = vmatprep.subr.mxu0 0.0
        %1155 = vmatpush1.msra.mxu0 0.0
        %1156 = vmatprep.subr.mxu0 0.0
        %1157 = vmatpush1.msra.mxu0 0.0
        %1158 = vmatprep.subr.mxu0 0.0
        %1159 = vmatpush1.msra.mxu0 0.0
        %1160 = vmatprep.subr.mxu0 0.0
        %1161 = vmatpush1.msra.mxu0 0.0
        %1162 = vmatprep.subr.mxu0 0.0
        %1163 = vmatpush1.msra.mxu0 0.0
        %1164 = vmatprep.subr.mxu0 0.0
        %1165 = vmatpush1.msra.mxu0 0.0
        %1166 = vmatprep.subr.mxu0 0.0
        %1167 = vmatpush1.msra.mxu0 0.0
        %1168 = vmatprep.subr.mxu0 0.0
        %1169 = vmatpush1.msra.mxu0 0.0
        %1170 = vmatprep.subr.mxu0 0.0
        %1171 = vmatpush1.msra.mxu0 0.0
        %1172 = vmatprep.subr.mxu0 0.0
        %1173 = vmatpush1.msra.mxu0 0.0
        %1174 = vmatprep.mubr.f32.mxu0 0.0
        %1175 = vmatmul.mubr.f32.gmra.mrb[0].mxu0 %v1045
        %v1176 = vpop.f32.mrb[0].mxu0
        %v1177 = vadd.f32 0.0, %v1176
        %v1178 = vpop.f32.mrb[0].mxu0
        %v1179 = vadd.f32 0.0, %v1178
        %1180 = vdwg.mxu0
        %1181 = vmatprep.subr.mxu0 %v1049
        %1182 = vmatpush1.msra.mxu0 %v1048
        %1183 = vmatprep.subr.mxu0 %v1053
        %1184 = vmatpush1.msra.mxu0 %v1052
        %1185 = vmatprep.subr.mxu0 %v1057
        %1186 = vmatpush1.msra.mxu0 %v1056
        %1187 = vmatprep.subr.mxu0 %v1061
        %1188 = vmatpush1.msra.mxu0 %v1060
        %1189 = vmatprep.subr.mxu0 %v1065
        %1190 = vmatpush1.msra.mxu0 %v1064
        %1191 = vmatprep.subr.mxu0 %v1069
        %1192 = vmatpush1.msra.mxu0 %v1068
        %1193 = vmatprep.subr.mxu0 %v1073
        %1194 = vmatpush1.msra.mxu0 %v1072
        %1195 = vmatprep.subr.mxu0 %v1077
        %1196 = vmatpush1.msra.mxu0 %v1076
        %1197 = vmatprep.subr.mxu0 %v1081
        %1198 = vmatpush1.msra.mxu0 %v1080
        %1199 = vmatprep.subr.mxu0 %v1085
        %1200 = vmatpush1.msra.mxu0 %v1084
        %1201 = vmatprep.subr.mxu0 %v1089
        %1202 = vmatpush1.msra.mxu0 %v1088
        %1203 = vmatprep.subr.mxu0 %v1093
        %1204 = vmatpush1.msra.mxu0 %v1092
        %1205 = vmatprep.subr.mxu0 %v1097
        %1206 = vmatpush1.msra.mxu0 %v1096
        %1207 = vmatprep.subr.mxu0 %v1101
        %1208 = vmatpush1.msra.mxu0 %v1100
        %1209 = vmatprep.subr.mxu0 %v1105
        %1210 = vmatpush1.msra.mxu0 %v1104
        %1211 = vmatprep.subr.mxu0 %v1109
        %1212 = vmatpush1.msra.mxu0 %v1108
        %1213 = vmatprep.subr.mxu0 0.0
        %1214 = vmatpush1.msra.mxu0 0.0
        %1215 = vmatprep.subr.mxu0 0.0
        %1216 = vmatpush1.msra.mxu0 0.0
        %1217 = vmatprep.subr.mxu0 0.0
        %1218 = vmatpush1.msra.mxu0 0.0
        %1219 = vmatprep.subr.mxu0 0.0
        %1220 = vmatpush1.msra.mxu0 0.0
        %1221 = vmatprep.subr.mxu0 0.0
        %1222 = vmatpush1.msra.mxu0 0.0
        %1223 = vmatprep.subr.mxu0 0.0
        %1224 = vmatpush1.msra.mxu0 0.0
        %1225 = vmatprep.subr.mxu0 0.0
        %1226 = vmatpush1.msra.mxu0 0.0
        %1227 = vmatprep.subr.mxu0 0.0
        %1228 = vmatpush1.msra.mxu0 0.0
        %1229 = vmatprep.subr.mxu0 0.0
        %1230 = vmatpush1.msra.mxu0 0.0
        %1231 = vmatprep.subr.mxu0 0.0
        %1232 = vmatpush1.msra.mxu0 0.0
        %1233 = vmatprep.subr.mxu0 0.0
        %1234 = vmatpush1.msra.mxu0 0.0
        %1235 = vmatprep.subr.mxu0 0.0
        %1236 = vmatpush1.msra.mxu0 0.0
        %1237 = vmatprep.subr.mxu0 0.0
        %1238 = vmatpush1.msra.mxu0 0.0
        %1239 = vmatprep.subr.mxu0 0.0
        %1240 = vmatpush1.msra.mxu0 0.0
        %1241 = vmatprep.subr.mxu0 0.0
        %1242 = vmatpush1.msra.mxu0 0.0
        %1243 = vmatprep.subr.mxu0 0.0
        %1244 = vmatpush1.msra.mxu0 0.0
        %1245 = vmatprep.mubr.f32.mxu0 0.0
        %1246 = vmatmul.mubr.f32.gmra.mrb[0].mxu0 %v1045
        %v1247 = vpop.f32.mrb[0].mxu0
        %v1248 = vadd.f32 0.0, %v1247
        %v1249 = vpop.f32.mrb[0].mxu0
        %v1250 = vadd.f32 0.0, %v1249
        %1251 = vdwg.mxu0
        %v1252 = vadd.f32 %v1041, %v1177
        %v1253 = vadd.f32 %v1042, %v1179
        %v1254 = vadd.f32 %v1043, %v1248
        %v1255 = vadd.f32 %v1044, %v1250
        %v1256 = vxor.u32 %v1252, 2147483648
        %v1257 = vmul.f32 %v1256, 1.442695
        %v1258 = vpow.pop %v1257
        %v1259 = vadd.f32 %v1258, 1.0
        %v1260 = vrcp.pop %v1259
        %v1261 = vmul.f32 1.0, %v1260
        %v1262 = vxor.u32 %v1253, 2147483648
        %v1263 = vmul.f32 %v1262, 1.442695
        %v1264 = vpow.pop %v1263
        %v1265 = vadd.f32 %v1264, 1.0
        %v1266 = vrcp.pop %v1265
        %v1267 = vmul.f32 1.0, %v1266
        %v1268 = vtanh.pop %v1254
        %v1269 = vxor.u32 %v1255, 2147483648
        %v1270 = vmul.f32 %v1269, 1.442695
        %v1271 = vpow.pop %v1270
        %v1272 = vadd.f32 %v1271, 1.0
        %v1273 = vrcp.pop %v1272
        %v1274 = vmul.f32 1.0, %v1273
        %v1275 = vld [vmem:[#allocation3] sm:$0xff]
        %v1276 = vmul.f32 %v1267, %v1275
        %v1277 = vmul.f32 %v1261, %v1268
        %v1278 = vadd.f32 %v1276, %v1277
        %v1279 = vtanh.pop %v1278
        %v1280 = vmul.f32 %v1274, %v1279
        %1281 = vst [vmem:[#allocation3] sm:$0xff] %v1278
        %1282 = vst [vmem:[#allocation2] sm:$0xff] %v1280
        %1283 = vst [vmem:[#allocation5 + $0x10] sm:$0xff] %v1280
        %v1284 = vld [vmem:[#allocation4 + $0x60] sm:$0xff]
        %v1285 = vld [vmem:[#allocation4 + $0x68] sm:$0xff]
        %v1286 = vld [vmem:[#allocation4 + $0x70] sm:$0xff]
        %v1287 = vld [vmem:[#allocation4 + $0x78] sm:$0xff]
        %v1288 = vld [vmem:[#allocation2] sm:$0xff]
        %v1289 = vld [vmem:[#allocation6] sm:$0xff]
        %v1290 = vld [vmem:[#allocation6 + $0x8] sm:$0xff]
        %v1291 = vld [vmem:[#allocation6 + $0x10] sm:$0xff]
        %v1292 = vld [vmem:[#allocation6 + $0x18] sm:$0xff]
        %v1293 = vld [vmem:[#allocation6 + $0x20] sm:$0xff]
        %v1294 = vld [vmem:[#allocation6 + $0x28] sm:$0xff]
        %v1295 = vld [vmem:[#allocation6 + $0x30] sm:$0xff]
        %v1296 = vld [vmem:[#allocation6 + $0x38] sm:$0xff]
        %v1297 = vld [vmem:[#allocation6 + $0x40] sm:$0xff]
        %v1298 = vld [vmem:[#allocation6 + $0x48] sm:$0xff]
        %v1299 = vld [vmem:[#allocation6 + $0x50] sm:$0xff]
        %v1300 = vld [vmem:[#allocation6 + $0x58] sm:$0xff]
        %v1301 = vld [vmem:[#allocation6 + $0x60] sm:$0xff]
        %v1302 = vld [vmem:[#allocation6 + $0x68] sm:$0xff]
        %v1303 = vld [vmem:[#allocation6 + $0x70] sm:$0xff]
        %v1304 = vld [vmem:[#allocation6 + $0x78] sm:$0xff]
        %v1305 = vld [vmem:[#allocation6 + $0x80] sm:$0xff]
        %v1306 = vld [vmem:[#allocation6 + $0x88] sm:$0xff]
        %v1307 = vld [vmem:[#allocation6 + $0x90] sm:$0xff]
        %v1308 = vld [vmem:[#allocation6 + $0x98] sm:$0xff]
        %v1309 = vld [vmem:[#allocation6 + $0xa0] sm:$0xff]
        %v1310 = vld [vmem:[#allocation6 + $0xa8] sm:$0xff]
        %v1311 = vld [vmem:[#allocation6 + $0xb0] sm:$0xff]
        %v1312 = vld [vmem:[#allocation6 + $0xb8] sm:$0xff]
        %v1313 = vld [vmem:[#allocation6 + $0xc0] sm:$0xff]
        %v1314 = vld [vmem:[#allocation6 + $0xc8] sm:$0xff]
        %v1315 = vld [vmem:[#allocation6 + $0xd0] sm:$0xff]
        %v1316 = vld [vmem:[#allocation6 + $0xd8] sm:$0xff]
        %v1317 = vld [vmem:[#allocation6 + $0xe0] sm:$0xff]
        %v1318 = vld [vmem:[#allocation6 + $0xe8] sm:$0xff]
        %v1319 = vld [vmem:[#allocation6 + $0xf0] sm:$0xff]
        %v1320 = vld [vmem:[#allocation6 + $0xf8] sm:$0xff]
        %v1321 = vld [vmem:[#allocation6 + $0x100] sm:$0xff]
        %v1322 = vld [vmem:[#allocation6 + $0x108] sm:$0xff]
        %v1323 = vld [vmem:[#allocation6 + $0x110] sm:$0xff]
        %v1324 = vld [vmem:[#allocation6 + $0x118] sm:$0xff]
        %v1325 = vld [vmem:[#allocation6 + $0x120] sm:$0xff]
        %v1326 = vld [vmem:[#allocation6 + $0x128] sm:$0xff]
        %v1327 = vld [vmem:[#allocation6 + $0x130] sm:$0xff]
        %v1328 = vld [vmem:[#allocation6 + $0x138] sm:$0xff]
        %v1329 = vld [vmem:[#allocation6 + $0x140] sm:$0xff]
        %v1330 = vld [vmem:[#allocation6 + $0x148] sm:$0xff]
        %v1331 = vld [vmem:[#allocation6 + $0x150] sm:$0xff]
        %v1332 = vld [vmem:[#allocation6 + $0x158] sm:$0xff]
        %v1333 = vld [vmem:[#allocation6 + $0x160] sm:$0xff]
        %v1334 = vld [vmem:[#allocation6 + $0x168] sm:$0xff]
        %v1335 = vld [vmem:[#allocation6 + $0x170] sm:$0xff]
        %v1336 = vld [vmem:[#allocation6 + $0x178] sm:$0xff]
        %v1337 = vld [vmem:[#allocation6 + $0x180] sm:$0xff]
        %v1338 = vld [vmem:[#allocation6 + $0x188] sm:$0xff]
        %v1339 = vld [vmem:[#allocation6 + $0x190] sm:$0xff]
        %v1340 = vld [vmem:[#allocation6 + $0x198] sm:$0xff]
        %v1341 = vld [vmem:[#allocation6 + $0x1a0] sm:$0xff]
        %v1342 = vld [vmem:[#allocation6 + $0x1a8] sm:$0xff]
        %v1343 = vld [vmem:[#allocation6 + $0x1b0] sm:$0xff]
        %v1344 = vld [vmem:[#allocation6 + $0x1b8] sm:$0xff]
        %v1345 = vld [vmem:[#allocation6 + $0x1c0] sm:$0xff]
        %v1346 = vld [vmem:[#allocation6 + $0x1c8] sm:$0xff]
        %v1347 = vld [vmem:[#allocation6 + $0x1d0] sm:$0xff]
        %v1348 = vld [vmem:[#allocation6 + $0x1d8] sm:$0xff]
        %v1349 = vld [vmem:[#allocation6 + $0x1e0] sm:$0xff]
        %v1350 = vld [vmem:[#allocation6 + $0x1e8] sm:$0xff]
        %v1351 = vld [vmem:[#allocation6 + $0x1f0] sm:$0xff]
        %v1352 = vld [vmem:[#allocation6 + $0x1f8] sm:$0xff]
        %1353 = vmatprep.subr.mxu0 %v1290
        %1354 = vmatpush1.msra.mxu0 %v1289
        %1355 = vmatprep.subr.mxu0 %v1294
        %1356 = vmatpush1.msra.mxu0 %v1293
        %1357 = vmatprep.subr.mxu0 %v1298
        %1358 = vmatpush1.msra.mxu0 %v1297
        %1359 = vmatprep.subr.mxu0 %v1302
        %1360 = vmatpush1.msra.mxu0 %v1301
        %1361 = vmatprep.subr.mxu0 %v1306
        %1362 = vmatpush1.msra.mxu0 %v1305
        %1363 = vmatprep.subr.mxu0 %v1310
        %1364 = vmatpush1.msra.mxu0 %v1309
        %1365 = vmatprep.subr.mxu0 %v1314
        %1366 = vmatpush1.msra.mxu0 %v1313
        %1367 = vmatprep.subr.mxu0 %v1318
        %1368 = vmatpush1.msra.mxu0 %v1317
        %1369 = vmatprep.subr.mxu0 %v1322
        %1370 = vmatpush1.msra.mxu0 %v1321
        %1371 = vmatprep.subr.mxu0 %v1326
        %1372 = vmatpush1.msra.mxu0 %v1325
        %1373 = vmatprep.subr.mxu0 %v1330
        %1374 = vmatpush1.msra.mxu0 %v1329
        %1375 = vmatprep.subr.mxu0 %v1334
        %1376 = vmatpush1.msra.mxu0 %v1333
        %1377 = vmatprep.subr.mxu0 %v1338
        %1378 = vmatpush1.msra.mxu0 %v1337
        %1379 = vmatprep.subr.mxu0 %v1342
        %1380 = vmatpush1.msra.mxu0 %v1341
        %1381 = vmatprep.subr.mxu0 %v1346
        %1382 = vmatpush1.msra.mxu0 %v1345
        %1383 = vmatprep.subr.mxu0 %v1350
        %1384 = vmatpush1.msra.mxu0 %v1349
        %1385 = vmatprep.subr.mxu0 0.0
        %1386 = vmatpush1.msra.mxu0 0.0
        %1387 = vmatprep.subr.mxu0 0.0
        %1388 = vmatpush1.msra.mxu0 0.0
        %1389 = vmatprep.subr.mxu0 0.0
        %1390 = vmatpush1.msra.mxu0 0.0
        %1391 = vmatprep.subr.mxu0 0.0
        %1392 = vmatpush1.msra.mxu0 0.0
        %1393 = vmatprep.subr.mxu0 0.0
        %1394 = vmatpush1.msra.mxu0 0.0
        %1395 = vmatprep.subr.mxu0 0.0
        %1396 = vmatpush1.msra.mxu0 0.0
        %1397 = vmatprep.subr.mxu0 0.0
        %1398 = vmatpush1.msra.mxu0 0.0
        %1399 = vmatprep.subr.mxu0 0.0
        %1400 = vmatpush1.msra.mxu0 0.0
        %1401 = vmatprep.subr.mxu0 0.0
        %1402 = vmatpush1.msra.mxu0 0.0
        %1403 = vmatprep.subr.mxu0 0.0
        %1404 = vmatpush1.msra.mxu0 0.0
        %1405 = vmatprep.subr.mxu0 0.0
        %1406 = vmatpush1.msra.mxu0 0.0
        %1407 = vmatprep.subr.mxu0 0.0
        %1408 = vmatpush1.msra.mxu0 0.0
        %1409 = vmatprep.subr.mxu0 0.0
        %1410 = vmatpush1.msra.mxu0 0.0
        %1411 = vmatprep.subr.mxu0 0.0
        %1412 = vmatpush1.msra.mxu0 0.0
        %1413 = vmatprep.subr.mxu0 0.0
        %1414 = vmatpush1.msra.mxu0 0.0
        %1415 = vmatprep.subr.mxu0 0.0
        %1416 = vmatpush1.msra.mxu0 0.0
        %1417 = vmatprep.mubr.f32.mxu0 0.0
        %1418 = vmatmul.mubr.f32.gmra.mrb[0].mxu0 %v1288
        %v1419 = vpop.f32.mrb[0].mxu0
        %v1420 = vadd.f32 0.0, %v1419
        %v1421 = vpop.f32.mrb[0].mxu0
        %v1422 = vadd.f32 0.0, %v1421
        %1423 = vdwg.mxu0
        %1424 = vmatprep.subr.mxu0 %v1292
        %1425 = vmatpush1.msra.mxu0 %v1291
        %1426 = vmatprep.subr.mxu0 %v1296
        %1427 = vmatpush1.msra.mxu0 %v1295
        %1428 = vmatprep.subr.mxu0 %v1300
        %1429 = vmatpush1.msra.mxu0 %v1299
        %1430 = vmatprep.subr.mxu0 %v1304
        %1431 = vmatpush1.msra.mxu0 %v1303
        %1432 = vmatprep.subr.mxu0 %v1308
        %1433 = vmatpush1.msra.mxu0 %v1307
        %1434 = vmatprep.subr.mxu0 %v1312
        %1435 = vmatpush1.msra.mxu0 %v1311
        %1436 = vmatprep.subr.mxu0 %v1316
        %1437 = vmatpush1.msra.mxu0 %v1315
        %1438 = vmatprep.subr.mxu0 %v1320
        %1439 = vmatpush1.msra.mxu0 %v1319
        %1440 = vmatprep.subr.mxu0 %v1324
        %1441 = vmatpush1.msra.mxu0 %v1323
        %1442 = vmatprep.subr.mxu0 %v1328
        %1443 = vmatpush1.msra.mxu0 %v1327
        %1444 = vmatprep.subr.mxu0 %v1332
        %1445 = vmatpush1.msra.mxu0 %v1331
        %1446 = vmatprep.subr.mxu0 %v1336
        %1447 = vmatpush1.msra.mxu0 %v1335
        %1448 = vmatprep.subr.mxu0 %v1340
        %1449 = vmatpush1.msra.mxu0 %v1339
        %1450 = vmatprep.subr.mxu0 %v1344
        %1451 = vmatpush1.msra.mxu0 %v1343
        %1452 = vmatprep.subr.mxu0 %v1348
        %1453 = vmatpush1.msra.mxu0 %v1347
        %1454 = vmatprep.subr.mxu0 %v1352
        %1455 = vmatpush1.msra.mxu0 %v1351
        %1456 = vmatprep.subr.mxu0 0.0
        %1457 = vmatpush1.msra.mxu0 0.0
        %1458 = vmatprep.subr.mxu0 0.0
        %1459 = vmatpush1.msra.mxu0 0.0
        %1460 = vmatprep.subr.mxu0 0.0
        %1461 = vmatpush1.msra.mxu0 0.0
        %1462 = vmatprep.subr.mxu0 0.0
        %1463 = vmatpush1.msra.mxu0 0.0
        %1464 = vmatprep.subr.mxu0 0.0
        %1465 = vmatpush1.msra.mxu0 0.0
        %1466 = vmatprep.subr.mxu0 0.0
        %1467 = vmatpush1.msra.mxu0 0.0
        %1468 = vmatprep.subr.mxu0 0.0
        %1469 = vmatpush1.msra.mxu0 0.0
        %1470 = vmatprep.subr.mxu0 0.0
        %1471 = vmatpush1.msra.mxu0 0.0
        %1472 = vmatprep.subr.mxu0 0.0
        %1473 = vmatpush1.msra.mxu0 0.0
        %1474 = vmatprep.subr.mxu0 0.0
        %1475 = vmatpush1.msra.mxu0 0.0
        %1476 = vmatprep.subr.mxu0 0.0
        %1477 = vmatpush1.msra.mxu0 0.0
        %1478 = vmatprep.subr.mxu0 0.0
        %1479 = vmatpush1.msra.mxu0 0.0
        %1480 = vmatprep.subr.mxu0 0.0
        %1481 = vmatpush1.msra.mxu0 0.0
        %1482 = vmatprep.subr.mxu0 0.0
        %1483 = vmatpush1.msra.mxu0 0.0
        %1484 = vmatprep.subr.mxu0 0.0
        %1485 = vmatpush1.msra.mxu0 0.0
        %1486 = vmatprep.subr.mxu0 0.0
        %1487 = vmatpush1.msra.mxu0 0.0
        %1488 = vmatprep.mubr.f32.mxu0 0.0
        %1489 = vmatmul.mubr.f32.gmra.mrb[0].mxu0 %v1288
        %v1490 = vpop.f32.mrb[0].mxu0
        %v1491 = vadd.f32 0.0, %v1490
        %v1492 = vpop.f32.mrb[0].mxu0
        %v1493 = vadd.f32 0.0, %v1492
        %1494 = vdwg.mxu0
        %v1495 = vadd.f32 %v1284, %v1420
        %v1496 = vadd.f32 %v1285, %v1422
        %v1497 = vadd.f32 %v1286, %v1491
        %v1498 = vadd.f32 %v1287, %v1493
        %v1499 = vxor.u32 %v1495, 2147483648
        %v1500 = vmul.f32 %v1499, 1.442695
        %v1501 = vpow.pop %v1500
        %v1502 = vadd.f32 %v1501, 1.0
        %v1503 = vrcp.pop %v1502
        %v1504 = vmul.f32 1.0, %v1503
        %v1505 = vxor.u32 %v1496, 2147483648
        %v1506 = vmul.f32 %v1505, 1.442695
        %v1507 = vpow.pop %v1506
        %v1508 = vadd.f32 %v1507, 1.0
        %v1509 = vrcp.pop %v1508
        %v1510 = vmul.f32 1.0, %v1509
        %v1511 = vtanh.pop %v1497
        %v1512 = vxor.u32 %v1498, 2147483648
        %v1513 = vmul.f32 %v1512, 1.442695
        %v1514 = vpow.pop %v1513
        %v1515 = vadd.f32 %v1514, 1.0
        %v1516 = vrcp.pop %v1515
        %v1517 = vmul.f32 1.0, %v1516
        %v1518 = vld [vmem:[#allocation3] sm:$0xff]
        %v1519 = vmul.f32 %v1510, %v1518
        %v1520 = vmul.f32 %v1504, %v1511
        %v1521 = vadd.f32 %v1519, %v1520
        %v1522 = vtanh.pop %v1521
        %v1523 = vmul.f32 %v1517, %v1522
        %1524 = vst [vmem:[#allocation3] sm:$0xff] %v1521
        %1525 = vst [vmem:[#allocation2] sm:$0xff] %v1523
        %1526 = vst [vmem:[#allocation5 + $0x18] sm:$0xff] %v1523
        %v1527 = vld [vmem:[#allocation5] sm:$0xff]
        %v1528 = vld [vmem:[#allocation5 + $0x8] sm:$0xff]
        %v1529 = vld [vmem:[#allocation5 + $0x10] sm:$0xff]
        %v1530 = vld [vmem:[#allocation5 + $0x18] sm:$0xff]
        %v1531 = vld [vmem:[#allocation9] sm:$0xff]
        %v1532 = vld [vmem:[#allocation9 + $0x8] sm:$0xff]
        %v1533 = vld [vmem:[#allocation9 + $0x10] sm:$0xff]
        %v1534 = vld [vmem:[#allocation9 + $0x18] sm:$0xff]
        %v1535 = vld [vmem:[#allocation9 + $0x20] sm:$0xff]
        %v1536 = vld [vmem:[#allocation9 + $0x28] sm:$0xff]
        %v1537 = vld [vmem:[#allocation9 + $0x30] sm:$0xff]
        %v1538 = vld [vmem:[#allocation9 + $0x38] sm:$0xff]
        %v1539 = vld [vmem:[#allocation9 + $0x40] sm:$0xff]
        %v1540 = vld [vmem:[#allocation9 + $0x48] sm:$0xff]
        %v1541 = vld [vmem:[#allocation9 + $0x50] sm:$0xff]
        %v1542 = vld [vmem:[#allocation9 + $0x58] sm:$0xff]
        %v1543 = vld [vmem:[#allocation9 + $0x60] sm:$0xff]
        %v1544 = vld [vmem:[#allocation9 + $0x68] sm:$0xff]
        %v1545 = vld [vmem:[#allocation9 + $0x70] sm:$0xff]
        %v1546 = vld [vmem:[#allocation9 + $0x78] sm:$0xff]
        %v1547 = vld [vmem:[%s5] sm:$0x1]
        %v1549 = vlaneseq
        %v1550 = vshrl.u32 %v1549, 7
        %v1551 = vsub.s32 0, %v1550
        %v1552 = vrot.slane %v1547, %v1551
        %1554 = vmatprep.subr.mxu0 0.0
        %1555 = vmatpush1.msra.mxu0 %v1531
        %1556 = vmatprep.subr.mxu0 0.0
        %1557 = vmatpush1.msra.mxu0 %v1532
        %1558 = vmatprep.subr.mxu0 0.0
        %1559 = vmatpush1.msra.mxu0 %v1533
        %1560 = vmatprep.subr.mxu0 0.0
        %1561 = vmatpush1.msra.mxu0 %v1534
        %1562 = vmatprep.subr.mxu0 0.0
        %1563 = vmatpush1.msra.mxu0 %v1535
        %1564 = vmatprep.subr.mxu0 0.0
        %1565 = vmatpush1.msra.mxu0 %v1536
        %1566 = vmatprep.subr.mxu0 0.0
        %1567 = vmatpush1.msra.mxu0 %v1537
        %1568 = vmatprep.subr.mxu0 0.0
        %1569 = vmatpush1.msra.mxu0 %v1538
        %1570 = vmatprep.subr.mxu0 0.0
        %1571 = vmatpush1.msra.mxu0 %v1539
        %1572 = vmatprep.subr.mxu0 0.0
        %1573 = vmatpush1.msra.mxu0 %v1540
        %1574 = vmatprep.subr.mxu0 0.0
        %1575 = vmatpush1.msra.mxu0 %v1541
        %1576 = vmatprep.subr.mxu0 0.0
        %1577 = vmatpush1.msra.mxu0 %v1542
        %1578 = vmatprep.subr.mxu0 0.0
        %1579 = vmatpush1.msra.mxu0 %v1543
        %1580 = vmatprep.subr.mxu0 0.0
        %1581 = vmatpush1.msra.mxu0 %v1544
        %1582 = vmatprep.subr.mxu0 0.0
        %1583 = vmatpush1.msra.mxu0 %v1545
        %1584 = vmatprep.subr.mxu0 0.0
        %1585 = vmatpush1.msra.mxu0 %v1546
        %1586 = vmatprep.subr.mxu0 0.0
        %1587 = vmatpush1.msra.mxu0 0.0
        %1588 = vmatprep.subr.mxu0 0.0
        %1589 = vmatpush1.msra.mxu0 0.0
        %1590 = vmatprep.subr.mxu0 0.0
        %1591 = vmatpush1.msra.mxu0 0.0
        %1592 = vmatprep.subr.mxu0 0.0
        %1593 = vmatpush1.msra.mxu0 0.0
        %1594 = vmatprep.subr.mxu0 0.0
        %1595 = vmatpush1.msra.mxu0 0.0
        %1596 = vmatprep.subr.mxu0 0.0
        %1597 = vmatpush1.msra.mxu0 0.0
        %1598 = vmatprep.subr.mxu0 0.0
        %1599 = vmatpush1.msra.mxu0 0.0
        %1600 = vmatprep.subr.mxu0 0.0
        %1601 = vmatpush1.msra.mxu0 0.0
        %1602 = vmatprep.subr.mxu0 0.0
        %1603 = vmatpush1.msra.mxu0 0.0
        %1604 = vmatprep.subr.mxu0 0.0
        %1605 = vmatpush1.msra.mxu0 0.0
        %1606 = vmatprep.subr.mxu0 0.0
        %1607 = vmatpush1.msra.mxu0 0.0
        %1608 = vmatprep.subr.mxu0 0.0
        %1609 = vmatpush1.msra.mxu0 0.0
        %1610 = vmatprep.subr.mxu0 0.0
        %1611 = vmatpush1.msra.mxu0 0.0
        %1612 = vmatprep.subr.mxu0 0.0
        %1613 = vmatpush1.msra.mxu0 0.0
        %1614 = vmatprep.subr.mxu0 0.0
        %1615 = vmatpush1.msra.mxu0 0.0
        %1616 = vmatprep.subr.mxu0 0.0
        %1617 = vmatpush1.msra.mxu0 0.0
        %1618 = vmatprep.mubr.f32.mxu0 0.0
        %1619 = vmatmul.mubr.f32.gmra.mrb[0].mxu0 %v1527
        %v1620 = vpop.f32.mrb[0].mxu0
        %v1621 = vadd.f32 %v1552, %v1620
        %v1622 = vpop.f32.mrb[0].mxu0
        %1623 = vmatprep.mubr.f32.mxu0 0.0
        %1624 = vmatmul.mubr.f32.gmra.mrb[0].mxu0 %v1528
        %v1625 = vpop.f32.mrb[0].mxu0
        %v1626 = vadd.f32 %v1552, %v1625
        %v1627 = vpop.f32.mrb[0].mxu0
        %1628 = vmatprep.mubr.f32.mxu0 0.0
        %1629 = vmatmul.mubr.f32.gmra.mrb[0].mxu0 %v1529
        %v1630 = vpop.f32.mrb[0].mxu0
        %v1631 = vadd.f32 %v1552, %v1630
        %v1632 = vpop.f32.mrb[0].mxu0
        %1633 = vmatprep.mubr.f32.mxu0 0.0
        %1634 = vmatmul.mubr.f32.gmra.mrb[0].mxu0 %v1530
        %v1635 = vpop.f32.mrb[0].mxu0
        %v1636 = vadd.f32 %v1552, %v1635
        %v1637 = vpop.f32.mrb[0].mxu0
        %1638 = vdwg.mxu0
        %1639 = vst [vmem:[%s298] sm:$0xff] %v1621
        %1640 = vst [vmem:[%s298 + $0x8] sm:$0xff] %v1626
        %1641 = vst [vmem:[%s298 + $0x10] sm:$0xff] %v1631
        %1642 = vst [vmem:[%s298 + $0x18] sm:$0xff] %v1636
        %s1643 = sand.u32 %s177, 1
        %s1644 = scalar_lea.sflag [#allocation8], %s1643
        %s1645 = sand.u32 %s177, 1
        %s1646 = smul.addr %s1645, 32
        %s1647 = scalar_lea.vmem [#allocation11], %s1646
        // Predicated region
        $region57: #{tpu_custom_call.1} parent=43 // pred_check
          %p1648 = pneg %p187
        $region58: #{tpu_custom_call.1} parent=43 // pred_check_branch
          %1650 = sbr.rel (%p1648) target = $region60
        $region59: #{tpu_custom_call.1} parent=43 // pred_region
          %s1652 = ssub.s32 512, 512
          %1653 = vsyncadd %s1644, %s1652
          %s1654 = smul.addr %s26, 4
          %s1655 = smul.addr %s27, 4
          %s1656 = sadd.s32 %s1654, %s1655
          %s1657 = smul.addr %s1656, 128
          %s1658 = scalar_lea.hbm %s6, %s1657
          %s1659 = sshll.u32 %s1647, 4
          %s1660 = int_to_ptr.vmem [resolvable:$true] %s1659
          %1665 = dma.vmem_to_hbm [thread:$0]  %s1660, 512, %s1658, %s1644, 128, 128, 8
        $region60: #{tpu_custom_call.1} parent=43 // pred_fallthru
          _
      $region44: #{tpu_custom_call.1} parent=5 // pred_fallthru
        _
      %p1666 = scmp.le.s32.totalorder 2, %s17
      // Predicated region
      $region61: #{tpu_custom_call.1} parent=5 // pred_check
        %p1667 = pneg %p1666
      $region62: #{tpu_custom_call.1} parent=5 // pred_check_branch
        %1669 = sbr.rel (%p1667) target = $region64
      $region63: #{tpu_custom_call.1} parent=5 // pred_region
        %s1670 = ssub.s32 %s17, 2
        // Predicated region
        $region65: #{tpu_custom_call.1} parent=63 // pred_check
          %p1671 = pneg %p193
        $region66: #{tpu_custom_call.1} parent=63 // pred_check_branch
          %1673 = sbr.rel (%p1671) target = $region68
        $region67: #{tpu_custom_call.1} parent=63 // pred_region
          %s1674 = sand.u32 %s178, 1
          %s1675 = scalar_lea.sflag [#allocation8], %s1674
          %s1676 = sand.u32 %s178, 1
          %s1677 = smul.addr %s1676, 32
          %s1678 = scalar_lea.vmem [#allocation11], %s1677
          %1679 = dma.done %s1675, 512
        $region68: #{tpu_custom_call.1} parent=63 // pred_fallthru
          _
      $region64: #{tpu_custom_call.1} parent=5 // pred_fallthru
        _
    $region6: #{tpu_custom_call.1} parent=1 // loop_footer
      %s21 = sadd.s32 1, %s17
    $region7: #{tpu_custom_call.1} parent=1 // loop_footer_branch
      %16 = sbr.rel target = $region3
    $region8: #{tpu_custom_call.1} parent=1 // loop_exit
      _
    %1680 = vsyncpa [#allocation7], 1
    %s1681 = scalar_lea.sflag [#allocation7], 1
    %1682 = vsyncpa %s1681, 1
    %1683 = vsyncpa [#allocation10], 1
    %1684 = vsyncpa [#allocation8], 1
    %s1685 = scalar_lea.sflag [#allocation8], 1
    %1686 = vsyncpa %s1685, 1

</llo_original>
